<compile_context>
chip_gen: v7x
topology: tpu7x:2x2x1
jax: 0.10.0
libtpu: 0.0.40
codegen_flags: <defaults>
</compile_context>

<pallas_src>
import functools

import jax
import jax.numpy as jnp
from jax import lax
from jax.experimental import pallas as pl
from jax.experimental.pallas import tpu as pltpu

NEG_SCALE = 3.786769


def _images_per_block(n_images: int) -> int:
    """All images in one grid step on single-TensorCore chips (v5e/v6e); one
    image per 'parallel' step when multiple TensorCores can share the grid."""
    try:
        kind = jax.devices()[0].device_kind.lower()
    except Exception:
        return 1
    single_tc = any(t in kind for t in
                    ("v5 lite", "v5e", "v5lite", "v6 lite", "v6e", "trillium"))
    return n_images if single_tc else 1


def _make_kernel(nb, ci, kh, kw, wp, k_pad, q):
    # Row order of the patch matrix: (kh, kw, ci) -- must match prepare_weights.
    offsets = [h * wp + w for h in range(kh) for w in range(kw)]
    pad_rows = k_pad - kh * kw * ci

    def kernel(xf_ref, w_ref, o_ref):
        w2 = w_ref[...]                                      # (OC_pad, K_pad) resident weights
        for i in range(nb):                                  # static unroll over images in block
            xi = xf_ref[i]                                   # (CI, L_pad) flattened dilated image
            # In-kernel im2col: 9 lane-shifted windows of the flat image.
            rows = [xi[:, off:off + q] for off in offsets]   # each (CI, Q)
            rows.append(jnp.zeros((pad_rows, q), xi.dtype))  # pad K to 128
            patches = jnp.concatenate(rows, axis=0)          # (K_pad, Q)
            y = jnp.dot(w2, patches,
                        preferred_element_type=jnp.float32)  # (OC_pad, Q) on the MXU
            # fused leaky-where epilogue
            o_ref[i, :, :] = jnp.where(y > 0, y, y * NEG_SCALE).astype(o_ref.dtype)

    return kernel


def prepare_weights(w):
    """One-time ConvTranspose2d weight prep (hoisted out of the per-call path):
    flip spatially, reorder columns to (kh, kw, ci), pad to (OC_pad, K_pad)."""
    ci, oc, kh, kw = w.shape
    k = kh * kw * ci
    oc_pad = pl.cdiv(oc, 128) * 128
    k_pad = pl.cdiv(k, 128) * 128
    wf = w[:, :, ::-1, ::-1]                                 # transposed conv == conv w/ flipped kernel
    w2 = wf.transpose(1, 2, 3, 0).reshape(oc, k)             # (OC, (kh, kw, ci))
    return jnp.pad(w2, ((0, oc_pad - oc), (0, k_pad - k))).astype(jnp.float32)


@functools.partial(jax.jit, static_argnames=("stride", "padding", "kh", "kw", "oc"))
def conv_transpose2d_leaky(x, w2, *, stride=2, padding=2, kh=3, kw=3, oc=375):
    """x: (N, CI, H, W) f32; w2: prepare_weights() output (OC_pad, K_pad) f32."""
    n, ci, h, w = x.shape
    oc_pad, k_pad = w2.shape
    ph, pw = kh - 1 - padding, kw - 1 - padding
    assert ph >= 0 and pw >= 0                               # holds for kernel=3, padding=2
    oh = (h - 1) * stride - 2 * padding + kh
    ow = (w - 1) * stride - 2 * padding + kw
    hp = (h - 1) * stride + 1 + 2 * ph                       # dilated + padded height
    wp = (w - 1) * stride + 1 + 2 * pw                       # dilated + padded width

    # Zero-dilate + pad (single lax.pad, ~28 KB) and flatten spatial per image.
    zero = jnp.zeros((), x.dtype)
    x_pad = lax.pad(x, zero, ((0, 0, 0), (0, 0, 0),
                              (ph, ph, stride - 1), (pw, pw, stride - 1)))

    q = pl.cdiv(oh * wp, 128) * 128                          # lane-dense output width
    l_pad = pl.cdiv(q + (kh - 1) * wp + (kw - 1), 128) * 128 # window reads stay in-bounds
    xf = jnp.pad(x_pad.reshape(n, ci, hp * wp),
                 ((0, 0), (0, 0), (0, l_pad - hp * wp)))     # (N, CI, L_pad), ~40 KB

    nb = _images_per_block(n)                                # images per grid step
    grid = (n // nb,)
    kernel = _make_kernel(nb, ci, kh, kw, wp, k_pad, q)

    out = pl.pallas_call(
        kernel,
        out_shape=jax.ShapeDtypeStruct((n, oc_pad, q), jnp.float32),
        grid_spec=pltpu.PrefetchScalarGridSpec(
            num_scalar_prefetch=0,
            grid=grid,
            in_specs=[
                pl.BlockSpec((nb, ci, l_pad), lambda g: (g, 0, 0)),  # image block
                pl.BlockSpec((oc_pad, k_pad), lambda g: (0, 0)),     # weights, resident
            ],
            out_specs=pl.BlockSpec((nb, oc_pad, q), lambda g: (g, 0, 0)),
        ),
        compiler_params=pltpu.CompilerParams(dimension_semantics=("parallel",)),
    )(xf, w2)

    # Valid columns are q_idx = oh_idx * wp + ow_idx with ow_idx < ow:
    # contiguous crop + reshape, no minor-dim transpose.
    return out[:, :oc, :oh * wp].reshape(n, oc, oh, wp)[:, :, :, :ow]


def reference(x, w, *, stride=2, padding=2):
    """Pure-JAX f32 reference (XLA conv) for correctness check."""
    ci, oc, kh, kw = w.shape
    ph, pw = kh - 1 - padding, kw - 1 - padding
    wf = w[:, :, ::-1, ::-1].transpose(1, 0, 2, 3)           # (OC, CI, KH, KW)
    y1 = lax.conv_general_dilated(
        x, wf, window_strides=(1, 1), padding=[(ph, ph), (pw, pw)],
        lhs_dilation=(stride, stride),
        dimension_numbers=("NCHW", "OIHW", "NCHW"))
    return jnp.where(y1 > 0, y1, y1 * NEG_SCALE)


if __name__ == "__main__":
    key = jax.random.PRNGKey(0)
    kx, kw_key = jax.random.split(key)

    # module channels fixed by __init__ (8 -> 375); small spatial / batch
    N, CI, H, W = 2, 8, 12, 10
    OC, KH, KW = 375, 3, 3
    STRIDE, PAD = 2, 2

    x = jax.random.normal(kx, (N, CI, H, W), dtype=jnp.float32)
    # deterministic PyTorch-like init: U(-1/sqrt(fan), 1/sqrt(fan))
    bound = 1.0 / (CI * KH * KW) ** 0.5
    w = jax.random.uniform(kw_key, (CI, OC, KH, KW), jnp.float32, -bound, bound)

    w2 = prepare_weights(w)                                  # one-time weight prep (hoisted)
    y = conv_transpose2d_leaky(x, w2, stride=STRIDE, padding=PAD, kh=KH, kw=KW, oc=OC)
    y = jax.block_until_ready(y)

    y_ref = jax.block_until_ready(reference(x, w, stride=STRIDE, padding=PAD))
    OH = (H - 1) * STRIDE - 2 * PAD + KH
    OW = (W - 1) * STRIDE - 2 * PAD + KW
    assert y.shape == (N, OC, OH, OW)
    if not jnp.allclose(y, y_ref, rtol=2e-2, atol=2e-2):
        raise AssertionError("Pallas result does not match reference")

    print("KERNEL_OK")
</pallas_src>

<mosaic_0001>
module attributes {stable_mosaic.version = 11 : i64} {
  func.func @kernel(%arg0: i32, %arg1: memref<1x8x640xf32, #tpu.memory_space<vmem>>, %arg2: memref<384x128xf32, #tpu.memory_space<vmem>>, %arg3: memref<1x384x512xf32, #tpu.memory_space<vmem>>) attributes {dimension_semantics = [#tpu.dimension_semantics<parallel>], iteration_bounds = array<i64: 2>, scalar_prefetch = 0 : i64, scratch_operands = 0 : i64, tpu.core_type = #tpu.core_type<tc>, window_params = [{transform_indices = @transform_0, window_bounds = array<i64: 1, 8, 640>}, {pipeline_mode = #tpu.pipeline_mode<synchronous>, transform_indices = @transform_1, window_bounds = array<i64: 384, 128>}, {transform_indices = @transform_2, window_bounds = array<i64: 1, 384, 512>}]} {
    %c0 = arith.constant 0 : index
    %c0_0 = arith.constant 0 : index
    %0 = vector.load %arg2[%c0, %c0_0] : memref<384x128xf32, #tpu.memory_space<vmem>>, vector<384x128xf32>
    %c0_1 = arith.constant 0 : index
    %c0_2 = arith.constant 0 : index
    %c0_3 = arith.constant 0 : index
    %1 = vector.load %arg1[%c0_1, %c0_2, %c0_3] : memref<1x8x640xf32, #tpu.memory_space<vmem>>, vector<1x8x640xf32>
    %2 = vector.shape_cast %1 : vector<1x8x640xf32> to vector<8x640xf32>
    %3 = vector.extract_strided_slice %2 {offsets = [0, 0], sizes = [8, 512], strides = [1, 1]} : vector<8x640xf32> to vector<8x512xf32>
    %4 = vector.extract_strided_slice %2 {offsets = [0, 1], sizes = [8, 512], strides = [1, 1]} : vector<8x640xf32> to vector<8x512xf32>
    %5 = vector.extract_strided_slice %2 {offsets = [0, 2], sizes = [8, 512], strides = [1, 1]} : vector<8x640xf32> to vector<8x512xf32>
    %6 = vector.extract_strided_slice %2 {offsets = [0, 19], sizes = [8, 512], strides = [1, 1]} : vector<8x640xf32> to vector<8x512xf32>
    %7 = vector.extract_strided_slice %2 {offsets = [0, 20], sizes = [8, 512], strides = [1, 1]} : vector<8x640xf32> to vector<8x512xf32>
    %8 = vector.extract_strided_slice %2 {offsets = [0, 21], sizes = [8, 512], strides = [1, 1]} : vector<8x640xf32> to vector<8x512xf32>
    %9 = vector.extract_strided_slice %2 {offsets = [0, 38], sizes = [8, 512], strides = [1, 1]} : vector<8x640xf32> to vector<8x512xf32>
    %10 = vector.extract_strided_slice %2 {offsets = [0, 39], sizes = [8, 512], strides = [1, 1]} : vector<8x640xf32> to vector<8x512xf32>
    %11 = vector.extract_strided_slice %2 {offsets = [0, 40], sizes = [8, 512], strides = [1, 1]} : vector<8x640xf32> to vector<8x512xf32>
    %cst = arith.constant 0.000000e+00 : f32
    %12 = vector.broadcast %cst : f32 to vector<56x512xf32>
    %13 = tpu.concatenate %3, %4, %5, %6, %7, %8, %9, %10, %11, %12 in 0 : vector<8x512xf32>, vector<8x512xf32>, vector<8x512xf32>, vector<8x512xf32>, vector<8x512xf32>, vector<8x512xf32>, vector<8x512xf32>, vector<8x512xf32>, vector<8x512xf32>, vector<56x512xf32> -> vector<128x512xf32>
    %cst_4 = arith.constant dense<0.000000e+00> : vector<384x512xf32>
    %14 = tpu.matmul %0, %13, %cst_4 {dimension_numbers = #tpu.dot_dimension_numbers<[1], [0], [0], [1], [0, 0, 1, 1], [], []>} : vector<384x128xf32>, vector<128x512xf32>, vector<384x512xf32> -> vector<384x512xf32>
    %cst_5 = arith.constant 0.000000e+00 : f32
    %15 = vector.broadcast %cst_5 : f32 to vector<384x512xf32>
    %16 = arith.cmpf ogt, %14, %15 : vector<384x512xf32>
    %cst_6 = arith.constant 3.78676891 : f32
    %17 = vector.broadcast %cst_6 : f32 to vector<384x512xf32>
    %18 = arith.mulf %14, %17 : vector<384x512xf32>
    %19 = arith.select %16, %14, %18 : vector<384x512xi1>, vector<384x512xf32>
    %c0_7 = arith.constant 0 : index
    %c0_8 = arith.constant 0 : index
    %c0_9 = arith.constant 0 : index
    %20 = vector.load %arg3[%c0_7, %c0_8, %c0_9] : memref<1x384x512xf32, #tpu.memory_space<vmem>>, vector<1x384x512xf32>
    %21 = vector.shape_cast %20 : vector<1x384x512xf32> to vector<384x512xf32>
    %22 = vector.shape_cast %19 : vector<384x512xf32> to vector<1x384x512xf32>
    tpu.vector_store %arg3[%c0_7, %c0_8, %c0_9], %22 {strides = array<i32>} : memref<1x384x512xf32, #tpu.memory_space<vmem>>, vector<1x384x512xf32>,
    return
  }
  func.func @transform_0(%arg0: i32) -> (i32, i32, i32) {
    %c0_i32 = arith.constant 0 : i32
    %c0_i32_0 = arith.constant 0 : i32
    %c0_i32_1 = arith.constant 0 : i32
    return %arg0, %c0_i32, %c0_i32_0 : i32, i32, i32
  }
  func.func @transform_1(%arg0: i32) -> (i32, i32) {
    %c0_i32 = arith.constant 0 : i32
    %c0_i32_0 = arith.constant 0 : i32
    %c0_i32_1 = arith.constant 0 : i32
    return %c0_i32, %c0_i32_0 : i32, i32
  }
  func.func @transform_2(%arg0: i32) -> (i32, i32, i32) {
    %c0_i32 = arith.constant 0 : i32
    %c0_i32_0 = arith.constant 0 : i32
    %c0_i32_1 = arith.constant 0 : i32
    return %arg0, %c0_i32, %c0_i32_0 : i32, i32, i32
  }
}

</mosaic_0001>

<llo_original>
// kernel: conv_transpose2d_leaky.1
$region0: #{conv_transpose2d_leaky.1}
  #allocation0 [shape = 'u32[]', space=smem, size = 0x4, offset = 0x4, fixed_abs, tag = 'smem constant byte address 0x4 - core index']
  #allocation1 [shape = 'u32[144,128]{1,0:T(1,128)}', space=vmem, size = 0x12000, scoped, tag = 'internal scratch']
  %s0 = inlined_call_operand.vmem [shape: f32[2,8,640], index: 0, kind: input, shape index: {}]
  %s1 = inlined_call_operand.hbm [shape: f32[384,128], index: 1, kind: input, shape index: {}]
  %s2 = inlined_call_operand.vmem [shape: f32[2,384,512], index: 2, kind: output, shape index: {}]
  %s3 = sld [smem:[#allocation0]]
  $region45: #{conv_transpose2d_leaky.1} parent=0
    _
  %s5 = ssub.s32 1, %s3
  %s6 = scalar_select 0, %s5, %s3
  $region1: #{conv_transpose2d_leaky.1} parent=0
    #allocation2 [shape = 'u8[196608]{0}', space=vmem, size = 0x30000, scoped, tag = 'input window, operand 1, single buffered']
    #allocation3 [shape = 's32[2]{0}', space=sflag, size = 0x8, scoped, tag = 'scoped memory for conv_transpose2d_leaky.1']
    %7 = vsyncpa [#allocation3], 0
    loop: start=0, step=1, limit=4
    $region2: #{conv_transpose2d_leaky.1} parent=1 // loop_pre_header
      _
    $region3: #{conv_transpose2d_leaky.1} parent=1 // loop_header
      %s9 = sphi 0, %s13
      %p10 = scmp.ge.s32.totalorder %s9, 4
      %s19 = sphi 0, %s21
      %s22 = sphi 0, %s19
      %s23 = sphi 0, %s22
      %s39 = sphi 0, %s23
      %s43 = sphi 0, %s43
      %s45 = sphi 0, %s43
      %s46 = sphi 0, %s45
      %s60 = sphi 0, %s46
      %s66 = sphi 0, %s68
      %s69 = sphi 0, %s66
      %s70 = sphi 0, %s69
      %s86 = sphi 0, %s70
    $region4: #{conv_transpose2d_leaky.1} parent=1 // loop_header_branch
      %12 = sbr.rel (%p10) target = $region8
    $region5: #{conv_transpose2d_leaky.1} parent=1 // loop_body
      %s14 = ssub.s32 %s9, 1
      %s15 = ssub.s32 %s9, 2
      %s16 = sadd.s32 %s9, 1
      %s17 = ssub.s32 %s9, %s16
      %p18 = scmp.eq.s32.totalorder %s17, 0
      %s20 = sadd.s32 %s19, 1
      %s21 = scalar_select %p18, %s19, %s20
      %p24 = pneg %p18
      %p25 = scmp.eq.s32.totalorder %s9, 1
      %p26 = por %p24, %p25
      %p27 = scmp.ne.s32.totalorder %s19, %s22
      %p28 = scmp.eq.s32.totalorder %s9, 0
      %p29 = por %p27, %p28
      %p30 = scmp.ne.s32.totalorder %s19, %s22
      %p31 = scmp.eq.s32.totalorder %s14, 1
      %p32 = por %p30, %p31
      %p33 = scmp.ne.s32.totalorder %s22, %s23
      %p34 = scmp.eq.s32.totalorder %s14, 0
      %p35 = por %p33, %p34
      %p36 = scmp.ne.s32.totalorder %s22, %s23
      %p37 = scmp.eq.s32.totalorder %s15, 1
      %p38 = por %p36, %p37
      %p40 = scmp.ne.s32.totalorder %s23, %s39
      %p41 = scmp.eq.s32.totalorder %s15, 0
      %p42 = por %p40, %p41
      %s44 = sadd.s32 %s43, 1
      %p47 = scmp.eq.s32.totalorder %s9, 1
      %p48 = scmp.ne.s32.totalorder %s43, %s45
      %p49 = scmp.eq.s32.totalorder %s9, 0
      %p50 = por %p48, %p49
      %p51 = scmp.ne.s32.totalorder %s43, %s45
      %p52 = scmp.eq.s32.totalorder %s14, 1
      %p53 = por %p51, %p52
      %p54 = scmp.ne.s32.totalorder %s45, %s46
      %p55 = scmp.eq.s32.totalorder %s14, 0
      %p56 = por %p54, %p55
      %p57 = scmp.ne.s32.totalorder %s45, %s46
      %p58 = scmp.eq.s32.totalorder %s15, 1
      %p59 = por %p57, %p58
      %p61 = scmp.ne.s32.totalorder %s46, %s60
      %p62 = scmp.eq.s32.totalorder %s15, 0
      %p63 = por %p61, %p62
      %s64 = ssub.s32 %s9, %s16
      %p65 = scmp.eq.s32.totalorder %s64, 0
      %s67 = sadd.s32 %s66, 1
      %s68 = scalar_select %p65, %s66, %s67
      %p71 = pneg %p65
      %p72 = scmp.eq.s32.totalorder %s9, 1
      %p73 = por %p71, %p72
      %p74 = scmp.ne.s32.totalorder %s66, %s69
      %p75 = scmp.eq.s32.totalorder %s9, 0
      %p76 = por %p74, %p75
      %p77 = scmp.ne.s32.totalorder %s66, %s69
      %p78 = scmp.eq.s32.totalorder %s14, 1
      %p79 = por %p77, %p78
      %p80 = scmp.ne.s32.totalorder %s69, %s70
      %p81 = scmp.eq.s32.totalorder %s14, 0
      %p82 = por %p80, %p81
      %p83 = scmp.ne.s32.totalorder %s69, %s70
      %p84 = scmp.eq.s32.totalorder %s15, 1
      %p85 = por %p83, %p84
      %p87 = scmp.ne.s32.totalorder %s70, %s86
      %p88 = scmp.eq.s32.totalorder %s15, 0
      %p89 = por %p87, %p88
      %p90 = scmp.le.s32.totalorder 1, %s9
      %p91 = scmp.lt.s32.totalorder %s9, 3
      %p92 = pnand %p90, %p91
      %p93 = pneg %p92
      // Predicated region
      $region9: #{conv_transpose2d_leaky.1} parent=5 // pred_check
        _
      $region10: #{conv_transpose2d_leaky.1} parent=5 // pred_check_branch
        %95 = sbr.rel (%p92) target = $region12
      $region11: #{conv_transpose2d_leaky.1} parent=5 // pred_region
        %s96 = ssub.s32 %s9, 1
        // Predicated region
        $region13: #{conv_transpose2d_leaky.1} parent=11 // pred_check
          %p97 = pneg %p56
        $region14: #{conv_transpose2d_leaky.1} parent=11 // pred_check_branch
          %99 = sbr.rel (%p97) target = $region16
        $region15: #{conv_transpose2d_leaky.1} parent=11 // pred_region
          %s101 = ssub.s32 6144, 6144
          %102 = vsyncadd [#allocation3], %s101
          %s103 = sshll.u32 [#allocation2], 4
          %s104 = int_to_ptr.vmem [resolvable:$true] %s103
          %109 = dma.hbm_to_vmem [thread:$0]  %s1, 6144, %s104, [#allocation3], 128, 128, 8
        $region16: #{conv_transpose2d_leaky.1} parent=11 // pred_fallthru
          _
      $region12: #{conv_transpose2d_leaky.1} parent=5 // pred_fallthru
        _
      %p110 = scmp.lt.s32.totalorder %s9, 2
      // Predicated region
      $region17: #{conv_transpose2d_leaky.1} parent=5 // pred_check
        %p111 = pneg %p110
      $region18: #{conv_transpose2d_leaky.1} parent=5 // pred_check_branch
        %113 = sbr.rel (%p111) target = $region20
      $region19: #{conv_transpose2d_leaky.1} parent=5 // pred_region
        // Predicated region
        $region21: #{conv_transpose2d_leaky.1} parent=19 // pred_check
          %p114 = pneg %p29
        $region22: #{conv_transpose2d_leaky.1} parent=19 // pred_check_branch
          %116 = sbr.rel (%p114) target = $region24
        $region23: #{conv_transpose2d_leaky.1} parent=19 // pred_region
          %p117 = scmp.lt.s32.totalorder %s9, 1
          %s118 = scalar_select %p117, %s9, 1
          %s119 = smul.addr %s118, 5
          %s120 = smul.addr %s119, 8
          %s121 = scalar_lea.vmem %s0, %s120
        $region24: #{conv_transpose2d_leaky.1} parent=19 // pred_fallthru
          _
      $region20: #{conv_transpose2d_leaky.1} parent=5 // pred_fallthru
        _
      %p122 = scmp.le.s32.totalorder 1, %s9
      %p123 = scmp.lt.s32.totalorder %s9, 3
      %p124 = pnand %p122, %p123
      %p125 = pneg %p124
      // Predicated region
      $region25: #{conv_transpose2d_leaky.1} parent=5 // pred_check
        _
      $region26: #{conv_transpose2d_leaky.1} parent=5 // pred_check_branch
        %127 = sbr.rel (%p124) target = $region28
      $region27: #{conv_transpose2d_leaky.1} parent=5 // pred_region
        %s128 = ssub.s32 %s9, 1
        // Predicated region
        $region29: #{conv_transpose2d_leaky.1} parent=27 // pred_check
          %p129 = pneg %p56
        $region30: #{conv_transpose2d_leaky.1} parent=27 // pred_check_branch
          %131 = sbr.rel (%p129) target = $region32
        $region31: #{conv_transpose2d_leaky.1} parent=27 // pred_region
          %132 = dma.done [#allocation3], 6144
        $region32: #{conv_transpose2d_leaky.1} parent=27 // pred_fallthru
          _
        %p133 = scmp.lt.s32.totalorder %s14, 1
        %s134 = scalar_select %p133, %s14, 1
        %s135 = smul.addr %s134, 5
        %s136 = smul.addr %s135, 8
        %s137 = scalar_lea.vmem %s0, %s136
        %p138 = pneg %p35
        %p139 = pneg %p32
        %p140 = pneg %p56
        %p141 = pneg %p53
        %p142 = pneg %p82
        %p143 = pneg %p79
        %p144 = scmp.lt.s32.totalorder %s14, 1
        %s145 = scalar_select %p144, %s14, 1
        %s146 = smul.addr %s145, 192
        %s147 = smul.addr %s146, 8
        %s148 = scalar_lea.vmem %s2, %s147
        %p149 = scmp.lt.s32.totalorder %s14, 1
        %s150 = scalar_select %p149, %s14, 1
        %s151 = smul.addr %s150, 5
        %s152 = smul.addr %s151, 8
        %s153 = scalar_lea.vmem %s0, %s152
        %p154 = scmp.lt.s32.totalorder %s14, 1
        %s155 = scalar_select %p154, %s14, 1
        %s156 = smul.addr %s155, 192
        %s157 = smul.addr %s156, 8
        %s158 = scalar_lea.vmem %s2, %s157
        %v159 = vld [vmem:[#allocation2] sm:$0xff]
        %v160 = vld [vmem:[#allocation2 + $0x8] sm:$0xff]
        %v161 = vld [vmem:[#allocation2 + $0x10] sm:$0xff]
        %v162 = vld [vmem:[#allocation2 + $0x18] sm:$0xff]
        %v163 = vld [vmem:[#allocation2 + $0x20] sm:$0xff]
        %v164 = vld [vmem:[#allocation2 + $0x28] sm:$0xff]
        %v165 = vld [vmem:[#allocation2 + $0x30] sm:$0xff]
        %v166 = vld [vmem:[#allocation2 + $0x38] sm:$0xff]
        %v167 = vld [vmem:[#allocation2 + $0x40] sm:$0xff]
        %v168 = vld [vmem:[#allocation2 + $0x48] sm:$0xff]
        %v169 = vld [vmem:[#allocation2 + $0x50] sm:$0xff]
        %v170 = vld [vmem:[#allocation2 + $0x58] sm:$0xff]
        %v171 = vld [vmem:[#allocation2 + $0x60] sm:$0xff]
        %v172 = vld [vmem:[#allocation2 + $0x68] sm:$0xff]
        %v173 = vld [vmem:[#allocation2 + $0x70] sm:$0xff]
        %v174 = vld [vmem:[#allocation2 + $0x78] sm:$0xff]
        %v175 = vld [vmem:[#allocation2 + $0x80] sm:$0xff]
        %v176 = vld [vmem:[#allocation2 + $0x88] sm:$0xff]
        %v177 = vld [vmem:[#allocation2 + $0x90] sm:$0xff]
        %v178 = vld [vmem:[#allocation2 + $0x98] sm:$0xff]
        %v179 = vld [vmem:[#allocation2 + $0xa0] sm:$0xff]
        %v180 = vld [vmem:[#allocation2 + $0xa8] sm:$0xff]
        %v181 = vld [vmem:[#allocation2 + $0xb0] sm:$0xff]
        %v182 = vld [vmem:[#allocation2 + $0xb8] sm:$0xff]
        %v183 = vld [vmem:[#allocation2 + $0xc0] sm:$0xff]
        %v184 = vld [vmem:[#allocation2 + $0xc8] sm:$0xff]
        %v185 = vld [vmem:[#allocation2 + $0xd0] sm:$0xff]
        %v186 = vld [vmem:[#allocation2 + $0xd8] sm:$0xff]
        %v187 = vld [vmem:[#allocation2 + $0xe0] sm:$0xff]
        %v188 = vld [vmem:[#allocation2 + $0xe8] sm:$0xff]
        %v189 = vld [vmem:[#allocation2 + $0xf0] sm:$0xff]
        %v190 = vld [vmem:[#allocation2 + $0xf8] sm:$0xff]
        %v191 = vld [vmem:[#allocation2 + $0x100] sm:$0xff]
        %v192 = vld [vmem:[#allocation2 + $0x108] sm:$0xff]
        %v193 = vld [vmem:[#allocation2 + $0x110] sm:$0xff]
        %v194 = vld [vmem:[#allocation2 + $0x118] sm:$0xff]
        %v195 = vld [vmem:[#allocation2 + $0x120] sm:$0xff]
        %v196 = vld [vmem:[#allocation2 + $0x128] sm:$0xff]
        %v197 = vld [vmem:[#allocation2 + $0x130] sm:$0xff]
        %v198 = vld [vmem:[#allocation2 + $0x138] sm:$0xff]
        %v199 = vld [vmem:[#allocation2 + $0x140] sm:$0xff]
        %v200 = vld [vmem:[#allocation2 + $0x148] sm:$0xff]
        %v201 = vld [vmem:[#allocation2 + $0x150] sm:$0xff]
        %v202 = vld [vmem:[#allocation2 + $0x158] sm:$0xff]
        %v203 = vld [vmem:[#allocation2 + $0x160] sm:$0xff]
        %v204 = vld [vmem:[#allocation2 + $0x168] sm:$0xff]
        %v205 = vld [vmem:[#allocation2 + $0x170] sm:$0xff]
        %v206 = vld [vmem:[#allocation2 + $0x178] sm:$0xff]
        %v207 = vld [vmem:[%s153] sm:$0xff]
        %v208 = vld [vmem:[%s153 + $0x8] sm:$0xff]
        %v209 = vld [vmem:[%s153 + $0x10] sm:$0xff]
        %v210 = vld [vmem:[%s153 + $0x18] sm:$0xff]
        %v211 = vld [vmem:[%s153 + $0x20] sm:$0xff]
        %217 = vrot.lane.b32.xlu0 %v207, 127
        %v218 = vpop.permute.xlu0 %217
        %219 = vrot.lane.b32.xlu0 %v208, 127
        %v220 = vpop.permute.xlu0 %219
        %221 = vrot.lane.b32.xlu0 %v209, 127
        %v222 = vpop.permute.xlu0 %221
        %223 = vrot.lane.b32.xlu0 %v210, 127
        %v224 = vpop.permute.xlu0 %223
        %225 = vrot.lane.b32.xlu0 %v211, 127
        %v226 = vpop.permute.xlu0 %225
        %vm227 = vcmask 1039360
        %v228 = vsel %vm227, %v218, %v220
        %v229 = vsel %vm227, %v220, %v222
        %v230 = vsel %vm227, %v222, %v224
        %v231 = vsel %vm227, %v224, %v226
        %236 = vrot.lane.b32.xlu0 %v207, 126
        %v237 = vpop.permute.xlu0 %236
        %238 = vrot.lane.b32.xlu0 %v208, 126
        %v239 = vpop.permute.xlu0 %238
        %240 = vrot.lane.b32.xlu0 %v209, 126
        %v241 = vpop.permute.xlu0 %240
        %242 = vrot.lane.b32.xlu0 %v210, 126
        %v243 = vpop.permute.xlu0 %242
        %244 = vrot.lane.b32.xlu0 %v211, 126
        %v245 = vpop.permute.xlu0 %244
        %vm246 = vcmask 1031168
        %v247 = vsel %vm246, %v237, %v239
        %v248 = vsel %vm246, %v239, %v241
        %v249 = vsel %vm246, %v241, %v243
        %v250 = vsel %vm246, %v243, %v245
        %255 = vrot.lane.b32.xlu0 %v207, 109
        %v256 = vpop.permute.xlu0 %255
        %257 = vrot.lane.b32.xlu0 %v208, 109
        %v258 = vpop.permute.xlu0 %257
        %259 = vrot.lane.b32.xlu0 %v209, 109
        %v260 = vpop.permute.xlu0 %259
        %261 = vrot.lane.b32.xlu0 %v210, 109
        %v262 = vpop.permute.xlu0 %261
        %263 = vrot.lane.b32.xlu0 %v211, 109
        %v264 = vpop.permute.xlu0 %263
        %vm265 = vcmask 891904
        %v266 = vsel %vm265, %v256, %v258
        %v267 = vsel %vm265, %v258, %v260
        %v268 = vsel %vm265, %v260, %v262
        %v269 = vsel %vm265, %v262, %v264
        %274 = vrot.lane.b32.xlu0 %v207, 108
        %v275 = vpop.permute.xlu0 %274
        %276 = vrot.lane.b32.xlu0 %v208, 108
        %v277 = vpop.permute.xlu0 %276
        %278 = vrot.lane.b32.xlu0 %v209, 108
        %v279 = vpop.permute.xlu0 %278
        %280 = vrot.lane.b32.xlu0 %v210, 108
        %v281 = vpop.permute.xlu0 %280
        %282 = vrot.lane.b32.xlu0 %v211, 108
        %v283 = vpop.permute.xlu0 %282
        %vm284 = vcmask 883712
        %v285 = vsel %vm284, %v275, %v277
        %v286 = vsel %vm284, %v277, %v279
        %v287 = vsel %vm284, %v279, %v281
        %v288 = vsel %vm284, %v281, %v283
        %293 = vrot.lane.b32.xlu0 %v207, 107
        %v294 = vpop.permute.xlu0 %293
        %295 = vrot.lane.b32.xlu0 %v208, 107
        %v296 = vpop.permute.xlu0 %295
        %297 = vrot.lane.b32.xlu0 %v209, 107
        %v298 = vpop.permute.xlu0 %297
        %299 = vrot.lane.b32.xlu0 %v210, 107
        %v300 = vpop.permute.xlu0 %299
        %301 = vrot.lane.b32.xlu0 %v211, 107
        %v302 = vpop.permute.xlu0 %301
        %vm303 = vcmask 875520
        %v304 = vsel %vm303, %v294, %v296
        %v305 = vsel %vm303, %v296, %v298
        %v306 = vsel %vm303, %v298, %v300
        %v307 = vsel %vm303, %v300, %v302
        %312 = vrot.lane.b32.xlu0 %v207, 90
        %v313 = vpop.permute.xlu0 %312
        %314 = vrot.lane.b32.xlu0 %v208, 90
        %v315 = vpop.permute.xlu0 %314
        %316 = vrot.lane.b32.xlu0 %v209, 90
        %v317 = vpop.permute.xlu0 %316
        %318 = vrot.lane.b32.xlu0 %v210, 90
        %v319 = vpop.permute.xlu0 %318
        %320 = vrot.lane.b32.xlu0 %v211, 90
        %v321 = vpop.permute.xlu0 %320
        %vm322 = vcmask 736256
        %v323 = vsel %vm322, %v313, %v315
        %v324 = vsel %vm322, %v315, %v317
        %v325 = vsel %vm322, %v317, %v319
        %v326 = vsel %vm322, %v319, %v321
        %331 = vrot.lane.b32.xlu0 %v207, 89
        %v332 = vpop.permute.xlu0 %331
        %333 = vrot.lane.b32.xlu0 %v208, 89
        %v334 = vpop.permute.xlu0 %333
        %335 = vrot.lane.b32.xlu0 %v209, 89
        %v336 = vpop.permute.xlu0 %335
        %337 = vrot.lane.b32.xlu0 %v210, 89
        %v338 = vpop.permute.xlu0 %337
        %339 = vrot.lane.b32.xlu0 %v211, 89
        %v340 = vpop.permute.xlu0 %339
        %vm341 = vcmask 728064
        %v342 = vsel %vm341, %v332, %v334
        %v343 = vsel %vm341, %v334, %v336
        %v344 = vsel %vm341, %v336, %v338
        %v345 = vsel %vm341, %v338, %v340
        %350 = vrot.lane.b32.xlu0 %v207, 88
        %v351 = vpop.permute.xlu0 %350
        %352 = vrot.lane.b32.xlu0 %v208, 88
        %v353 = vpop.permute.xlu0 %352
        %354 = vrot.lane.b32.xlu0 %v209, 88
        %v355 = vpop.permute.xlu0 %354
        %356 = vrot.lane.b32.xlu0 %v210, 88
        %v357 = vpop.permute.xlu0 %356
        %358 = vrot.lane.b32.xlu0 %v211, 88
        %v359 = vpop.permute.xlu0 %358
        %vm360 = vcmask 719872
        %v361 = vsel %vm360, %v351, %v353
        %v362 = vsel %vm360, %v353, %v355
        %v363 = vsel %vm360, %v355, %v357
        %v364 = vsel %vm360, %v357, %v359
        %369 = vmatprep.subr.mxu0 %v208
        %370 = vmatpush1.msra.mxu0 %v207
        %371 = vmatprep.subr.mxu0 %v229
        %372 = vmatpush1.msra.mxu0 %v228
        %373 = vmatprep.subr.mxu0 %v248
        %374 = vmatpush1.msra.mxu0 %v247
        %375 = vmatprep.subr.mxu0 %v267
        %376 = vmatpush1.msra.mxu0 %v266
        %377 = vmatprep.subr.mxu0 %v286
        %378 = vmatpush1.msra.mxu0 %v285
        %379 = vmatprep.subr.mxu0 %v305
        %380 = vmatpush1.msra.mxu0 %v304
        %381 = vmatprep.subr.mxu0 %v324
        %382 = vmatpush1.msra.mxu0 %v323
        %383 = vmatprep.subr.mxu0 %v343
        %384 = vmatpush1.msra.mxu0 %v342
        %385 = vmatprep.subr.mxu0 %v362
        %386 = vmatpush1.msra.mxu0 %v361
        %387 = vmatprep.subr.mxu0 0.0
        %388 = vmatpush1.msra.mxu0 0.0
        %389 = vmatprep.subr.mxu0 0.0
        %390 = vmatpush1.msra.mxu0 0.0
        %391 = vmatprep.subr.mxu0 0.0
        %392 = vmatpush1.msra.mxu0 0.0
        %393 = vmatprep.subr.mxu0 0.0
        %394 = vmatpush1.msra.mxu0 0.0
        %395 = vmatprep.subr.mxu0 0.0
        %396 = vmatpush1.msra.mxu0 0.0
        %397 = vmatprep.subr.mxu0 0.0
        %398 = vmatpush1.msra.mxu0 0.0
        %399 = vmatprep.subr.mxu0 0.0
        %400 = vmatpush1.msra.mxu0 0.0
        %401 = vmatprep.subr.mxu0 0.0
        %402 = vmatpush1.msra.mxu0 0.0
        %403 = vmatprep.subr.mxu0 0.0
        %404 = vmatpush1.msra.mxu0 0.0
        %405 = vmatprep.subr.mxu0 0.0
        %406 = vmatpush1.msra.mxu0 0.0
        %407 = vmatprep.subr.mxu0 0.0
        %408 = vmatpush1.msra.mxu0 0.0
        %409 = vmatprep.subr.mxu0 0.0
        %410 = vmatpush1.msra.mxu0 0.0
        %411 = vmatprep.subr.mxu0 0.0
        %412 = vmatpush1.msra.mxu0 0.0
        %413 = vmatprep.subr.mxu0 0.0
        %414 = vmatpush1.msra.mxu0 0.0
        %415 = vmatprep.subr.mxu0 0.0
        %416 = vmatpush1.msra.mxu0 0.0
        %417 = vmatprep.subr.mxu0 0.0
        %418 = vmatpush1.msra.mxu0 0.0
        %419 = vmatprep.subr.mxu0 0.0
        %420 = vmatpush1.msra.mxu0 0.0
        %421 = vmatprep.subr.mxu0 0.0
        %422 = vmatpush1.msra.mxu0 0.0
        %423 = vmatprep.subr.mxu0 0.0
        %424 = vmatpush1.msra.mxu0 0.0
        %425 = vmatprep.subr.mxu0 0.0
        %426 = vmatpush1.msra.mxu0 0.0
        %427 = vmatprep.subr.mxu0 0.0
        %428 = vmatpush1.msra.mxu0 0.0
        %429 = vmatprep.subr.mxu0 0.0
        %430 = vmatpush1.msra.mxu0 0.0
        %431 = vmatprep.subr.mxu0 0.0
        %432 = vmatpush1.msra.mxu0 0.0
        %433 = vmatprep.mubr.f32.mxu0 0.0
        %434 = vmatmul.mubr.f32.gmra.mrb[0].mxu0 %v159
        %v435 = vpop.f32.mrb[0].mxu0
        %v436 = vadd.f32 0.0, %v435
        %v437 = vpop.f32.mrb[0].mxu0
        %v438 = vadd.f32 0.0, %v437
        %439 = vmatprep.mubr.f32.mxu0 0.0
        %440 = vmatmul.mubr.f32.gmra.mrb[0].mxu0 %v160
        %v441 = vpop.f32.mrb[0].mxu0
        %v442 = vadd.f32 0.0, %v441
        %v443 = vpop.f32.mrb[0].mxu0
        %v444 = vadd.f32 0.0, %v443
        %445 = vmatprep.mubr.f32.mxu0 0.0
        %446 = vmatmul.mubr.f32.gmra.mrb[0].mxu0 %v161
        %v447 = vpop.f32.mrb[0].mxu0
        %v448 = vadd.f32 0.0, %v447
        %v449 = vpop.f32.mrb[0].mxu0
        %v450 = vadd.f32 0.0, %v449
        %451 = vmatprep.mubr.f32.mxu0 0.0
        %452 = vmatmul.mubr.f32.gmra.mrb[0].mxu0 %v162
        %v453 = vpop.f32.mrb[0].mxu0
        %v454 = vadd.f32 0.0, %v453
        %v455 = vpop.f32.mrb[0].mxu0
        %v456 = vadd.f32 0.0, %v455
        %457 = vmatprep.mubr.f32.mxu0 0.0
        %458 = vmatmul.mubr.f32.gmra.mrb[0].mxu0 %v163
        %v459 = vpop.f32.mrb[0].mxu0
        %v460 = vadd.f32 0.0, %v459
        %v461 = vpop.f32.mrb[0].mxu0
        %v462 = vadd.f32 0.0, %v461
        %463 = vmatprep.mubr.f32.mxu0 0.0
        %464 = vmatmul.mubr.f32.gmra.mrb[0].mxu0 %v164
        %v465 = vpop.f32.mrb[0].mxu0
        %v466 = vadd.f32 0.0, %v465
        %v467 = vpop.f32.mrb[0].mxu0
        %v468 = vadd.f32 0.0, %v467
        %469 = vmatprep.mubr.f32.mxu0 0.0
        %470 = vmatmul.mubr.f32.gmra.mrb[0].mxu0 %v165
        %v471 = vpop.f32.mrb[0].mxu0
        %v472 = vadd.f32 0.0, %v471
        %v473 = vpop.f32.mrb[0].mxu0
        %v474 = vadd.f32 0.0, %v473
        %475 = vmatprep.mubr.f32.mxu0 0.0
        %476 = vmatmul.mubr.f32.gmra.mrb[0].mxu0 %v166
        %v477 = vpop.f32.mrb[0].mxu0
        %v478 = vadd.f32 0.0, %v477
        %v479 = vpop.f32.mrb[0].mxu0
        %v480 = vadd.f32 0.0, %v479
        %481 = vmatprep.mubr.f32.mxu0 0.0
        %482 = vmatmul.mubr.f32.gmra.mrb[0].mxu0 %v167
        %v483 = vpop.f32.mrb[0].mxu0
        %v484 = vadd.f32 0.0, %v483
        %v485 = vpop.f32.mrb[0].mxu0
        %v486 = vadd.f32 0.0, %v485
        %487 = vmatprep.mubr.f32.mxu0 0.0
        %488 = vmatmul.mubr.f32.gmra.mrb[0].mxu0 %v168
        %v489 = vpop.f32.mrb[0].mxu0
        %v490 = vadd.f32 0.0, %v489
        %v491 = vpop.f32.mrb[0].mxu0
        %v492 = vadd.f32 0.0, %v491
        %493 = vmatprep.mubr.f32.mxu0 0.0
        %494 = vmatmul.mubr.f32.gmra.mrb[0].mxu0 %v169
        %v495 = vpop.f32.mrb[0].mxu0
        %v496 = vadd.f32 0.0, %v495
        %v497 = vpop.f32.mrb[0].mxu0
        %v498 = vadd.f32 0.0, %v497
        %499 = vmatprep.mubr.f32.mxu0 0.0
        %500 = vmatmul.mubr.f32.gmra.mrb[0].mxu0 %v170
        %v501 = vpop.f32.mrb[0].mxu0
        %v502 = vadd.f32 0.0, %v501
        %v503 = vpop.f32.mrb[0].mxu0
        %v504 = vadd.f32 0.0, %v503
        %505 = vmatprep.mubr.f32.mxu0 0.0
        %506 = vmatmul.mubr.f32.gmra.mrb[0].mxu0 %v171
        %v507 = vpop.f32.mrb[0].mxu0
        %v508 = vadd.f32 0.0, %v507
        %v509 = vpop.f32.mrb[0].mxu0
        %v510 = vadd.f32 0.0, %v509
        %511 = vmatprep.mubr.f32.mxu0 0.0
        %512 = vmatmul.mubr.f32.gmra.mrb[0].mxu0 %v172
        %v513 = vpop.f32.mrb[0].mxu0
        %v514 = vadd.f32 0.0, %v513
        %v515 = vpop.f32.mrb[0].mxu0
        %v516 = vadd.f32 0.0, %v515
        %517 = vmatprep.mubr.f32.mxu0 0.0
        %518 = vmatmul.mubr.f32.gmra.mrb[0].mxu0 %v173
        %v519 = vpop.f32.mrb[0].mxu0
        %v520 = vadd.f32 0.0, %v519
        %v521 = vpop.f32.mrb[0].mxu0
        %v522 = vadd.f32 0.0, %v521
        %523 = vmatprep.mubr.f32.mxu0 0.0
        %524 = vmatmul.mubr.f32.gmra.mrb[0].mxu0 %v174
        %v525 = vpop.f32.mrb[0].mxu0
        %v526 = vadd.f32 0.0, %v525
        %v527 = vpop.f32.mrb[0].mxu0
        %v528 = vadd.f32 0.0, %v527
        %529 = vmatprep.mubr.f32.mxu0 0.0
        %530 = vmatmul.mubr.f32.gmra.mrb[0].mxu0 %v175
        %v531 = vpop.f32.mrb[0].mxu0
        %v532 = vadd.f32 0.0, %v531
        %v533 = vpop.f32.mrb[0].mxu0
        %v534 = vadd.f32 0.0, %v533
        %535 = vmatprep.mubr.f32.mxu0 0.0
        %536 = vmatmul.mubr.f32.gmra.mrb[0].mxu0 %v176
        %v537 = vpop.f32.mrb[0].mxu0
        %v538 = vadd.f32 0.0, %v537
        %v539 = vpop.f32.mrb[0].mxu0
        %v540 = vadd.f32 0.0, %v539
        %541 = vmatprep.mubr.f32.mxu0 0.0
        %542 = vmatmul.mubr.f32.gmra.mrb[0].mxu0 %v177
        %v543 = vpop.f32.mrb[0].mxu0
        %v544 = vadd.f32 0.0, %v543
        %v545 = vpop.f32.mrb[0].mxu0
        %v546 = vadd.f32 0.0, %v545
        %547 = vmatprep.mubr.f32.mxu0 0.0
        %548 = vmatmul.mubr.f32.gmra.mrb[0].mxu0 %v178
        %v549 = vpop.f32.mrb[0].mxu0
        %v550 = vadd.f32 0.0, %v549
        %v551 = vpop.f32.mrb[0].mxu0
        %v552 = vadd.f32 0.0, %v551
        %553 = vmatprep.mubr.f32.mxu0 0.0
        %554 = vmatmul.mubr.f32.gmra.mrb[0].mxu0 %v179
        %v555 = vpop.f32.mrb[0].mxu0
        %v556 = vadd.f32 0.0, %v555
        %v557 = vpop.f32.mrb[0].mxu0
        %v558 = vadd.f32 0.0, %v557
        %559 = vmatprep.mubr.f32.mxu0 0.0
        %560 = vmatmul.mubr.f32.gmra.mrb[0].mxu0 %v180
        %v561 = vpop.f32.mrb[0].mxu0
        %v562 = vadd.f32 0.0, %v561
        %v563 = vpop.f32.mrb[0].mxu0
        %v564 = vadd.f32 0.0, %v563
        %565 = vmatprep.mubr.f32.mxu0 0.0
        %566 = vmatmul.mubr.f32.gmra.mrb[0].mxu0 %v181
        %v567 = vpop.f32.mrb[0].mxu0
        %v568 = vadd.f32 0.0, %v567
        %v569 = vpop.f32.mrb[0].mxu0
        %v570 = vadd.f32 0.0, %v569
        %571 = vmatprep.mubr.f32.mxu0 0.0
        %572 = vmatmul.mubr.f32.gmra.mrb[0].mxu0 %v182
        %v573 = vpop.f32.mrb[0].mxu0
        %v574 = vadd.f32 0.0, %v573
        %v575 = vpop.f32.mrb[0].mxu0
        %v576 = vadd.f32 0.0, %v575
        %577 = vmatprep.mubr.f32.mxu0 0.0
        %578 = vmatmul.mubr.f32.gmra.mrb[0].mxu0 %v183
        %v579 = vpop.f32.mrb[0].mxu0
        %v580 = vadd.f32 0.0, %v579
        %v581 = vpop.f32.mrb[0].mxu0
        %v582 = vadd.f32 0.0, %v581
        %583 = vmatprep.mubr.f32.mxu0 0.0
        %584 = vmatmul.mubr.f32.gmra.mrb[0].mxu0 %v184
        %v585 = vpop.f32.mrb[0].mxu0
        %v586 = vadd.f32 0.0, %v585
        %v587 = vpop.f32.mrb[0].mxu0
        %v588 = vadd.f32 0.0, %v587
        %589 = vmatprep.mubr.f32.mxu0 0.0
        %590 = vmatmul.mubr.f32.gmra.mrb[0].mxu0 %v185
        %v591 = vpop.f32.mrb[0].mxu0
        %v592 = vadd.f32 0.0, %v591
        %v593 = vpop.f32.mrb[0].mxu0
        %v594 = vadd.f32 0.0, %v593
        %595 = vmatprep.mubr.f32.mxu0 0.0
        %596 = vmatmul.mubr.f32.gmra.mrb[0].mxu0 %v186
        %v597 = vpop.f32.mrb[0].mxu0
        %v598 = vadd.f32 0.0, %v597
        %v599 = vpop.f32.mrb[0].mxu0
        %v600 = vadd.f32 0.0, %v599
        %601 = vmatprep.mubr.f32.mxu0 0.0
        %602 = vmatmul.mubr.f32.gmra.mrb[0].mxu0 %v187
        %v603 = vpop.f32.mrb[0].mxu0
        %v604 = vadd.f32 0.0, %v603
        %v605 = vpop.f32.mrb[0].mxu0
        %v606 = vadd.f32 0.0, %v605
        %607 = vmatprep.mubr.f32.mxu0 0.0
        %608 = vmatmul.mubr.f32.gmra.mrb[0].mxu0 %v188
        %v609 = vpop.f32.mrb[0].mxu0
        %v610 = vadd.f32 0.0, %v609
        %v611 = vpop.f32.mrb[0].mxu0
        %v612 = vadd.f32 0.0, %v611
        %613 = vmatprep.mubr.f32.mxu0 0.0
        %614 = vmatmul.mubr.f32.gmra.mrb[0].mxu0 %v189
        %v615 = vpop.f32.mrb[0].mxu0
        %v616 = vadd.f32 0.0, %v615
        %v617 = vpop.f32.mrb[0].mxu0
        %v618 = vadd.f32 0.0, %v617
        %619 = vmatprep.mubr.f32.mxu0 0.0
        %620 = vmatmul.mubr.f32.gmra.mrb[0].mxu0 %v190
        %v621 = vpop.f32.mrb[0].mxu0
        %v622 = vadd.f32 0.0, %v621
        %v623 = vpop.f32.mrb[0].mxu0
        %v624 = vadd.f32 0.0, %v623
        %625 = vmatprep.mubr.f32.mxu0 0.0
        %626 = vmatmul.mubr.f32.gmra.mrb[0].mxu0 %v191
        %v627 = vpop.f32.mrb[0].mxu0
        %v628 = vadd.f32 0.0, %v627
        %v629 = vpop.f32.mrb[0].mxu0
        %v630 = vadd.f32 0.0, %v629
        %631 = vmatprep.mubr.f32.mxu0 0.0
        %632 = vmatmul.mubr.f32.gmra.mrb[0].mxu0 %v192
        %v633 = vpop.f32.mrb[0].mxu0
        %v634 = vadd.f32 0.0, %v633
        %v635 = vpop.f32.mrb[0].mxu0
        %v636 = vadd.f32 0.0, %v635
        %637 = vmatprep.mubr.f32.mxu0 0.0
        %638 = vmatmul.mubr.f32.gmra.mrb[0].mxu0 %v193
        %v639 = vpop.f32.mrb[0].mxu0
        %v640 = vadd.f32 0.0, %v639
        %v641 = vpop.f32.mrb[0].mxu0
        %v642 = vadd.f32 0.0, %v641
        %643 = vmatprep.mubr.f32.mxu0 0.0
        %644 = vmatmul.mubr.f32.gmra.mrb[0].mxu0 %v194
        %v645 = vpop.f32.mrb[0].mxu0
        %v646 = vadd.f32 0.0, %v645
        %v647 = vpop.f32.mrb[0].mxu0
        %v648 = vadd.f32 0.0, %v647
        %649 = vmatprep.mubr.f32.mxu0 0.0
        %650 = vmatmul.mubr.f32.gmra.mrb[0].mxu0 %v195
        %v651 = vpop.f32.mrb[0].mxu0
        %v652 = vadd.f32 0.0, %v651
        %v653 = vpop.f32.mrb[0].mxu0
        %v654 = vadd.f32 0.0, %v653
        %655 = vmatprep.mubr.f32.mxu0 0.0
        %656 = vmatmul.mubr.f32.gmra.mrb[0].mxu0 %v196
        %v657 = vpop.f32.mrb[0].mxu0
        %v658 = vadd.f32 0.0, %v657
        %v659 = vpop.f32.mrb[0].mxu0
        %v660 = vadd.f32 0.0, %v659
        %661 = vmatprep.mubr.f32.mxu0 0.0
        %662 = vmatmul.mubr.f32.gmra.mrb[0].mxu0 %v197
        %v663 = vpop.f32.mrb[0].mxu0
        %v664 = vadd.f32 0.0, %v663
        %v665 = vpop.f32.mrb[0].mxu0
        %v666 = vadd.f32 0.0, %v665
        %667 = vmatprep.mubr.f32.mxu0 0.0
        %668 = vmatmul.mubr.f32.gmra.mrb[0].mxu0 %v198
        %v669 = vpop.f32.mrb[0].mxu0
        %v670 = vadd.f32 0.0, %v669
        %v671 = vpop.f32.mrb[0].mxu0
        %v672 = vadd.f32 0.0, %v671
        %673 = vmatprep.mubr.f32.mxu0 0.0
        %674 = vmatmul.mubr.f32.gmra.mrb[0].mxu0 %v199
        %v675 = vpop.f32.mrb[0].mxu0
        %v676 = vadd.f32 0.0, %v675
        %v677 = vpop.f32.mrb[0].mxu0
        %v678 = vadd.f32 0.0, %v677
        %679 = vmatprep.mubr.f32.mxu0 0.0
        %680 = vmatmul.mubr.f32.gmra.mrb[0].mxu0 %v200
        %v681 = vpop.f32.mrb[0].mxu0
        %v682 = vadd.f32 0.0, %v681
        %v683 = vpop.f32.mrb[0].mxu0
        %v684 = vadd.f32 0.0, %v683
        %685 = vmatprep.mubr.f32.mxu0 0.0
        %686 = vmatmul.mubr.f32.gmra.mrb[0].mxu0 %v201
        %v687 = vpop.f32.mrb[0].mxu0
        %v688 = vadd.f32 0.0, %v687
        %v689 = vpop.f32.mrb[0].mxu0
        %v690 = vadd.f32 0.0, %v689
        %691 = vmatprep.mubr.f32.mxu0 0.0
        %692 = vmatmul.mubr.f32.gmra.mrb[0].mxu0 %v202
        %v693 = vpop.f32.mrb[0].mxu0
        %v694 = vadd.f32 0.0, %v693
        %v695 = vpop.f32.mrb[0].mxu0
        %v696 = vadd.f32 0.0, %v695
        %697 = vmatprep.mubr.f32.mxu0 0.0
        %698 = vmatmul.mubr.f32.gmra.mrb[0].mxu0 %v203
        %v699 = vpop.f32.mrb[0].mxu0
        %v700 = vadd.f32 0.0, %v699
        %v701 = vpop.f32.mrb[0].mxu0
        %v702 = vadd.f32 0.0, %v701
        %703 = vmatprep.mubr.f32.mxu0 0.0
        %704 = vmatmul.mubr.f32.gmra.mrb[0].mxu0 %v204
        %v705 = vpop.f32.mrb[0].mxu0
        %v706 = vadd.f32 0.0, %v705
        %v707 = vpop.f32.mrb[0].mxu0
        %v708 = vadd.f32 0.0, %v707
        %709 = vmatprep.mubr.f32.mxu0 0.0
        %710 = vmatmul.mubr.f32.gmra.mrb[0].mxu0 %v205
        %v711 = vpop.f32.mrb[0].mxu0
        %v712 = vadd.f32 0.0, %v711
        %v713 = vpop.f32.mrb[0].mxu0
        %v714 = vadd.f32 0.0, %v713
        %715 = vmatprep.mubr.f32.mxu0 0.0
        %716 = vmatmul.mubr.f32.gmra.mrb[0].mxu0 %v206
        %v717 = vpop.f32.mrb[0].mxu0
        %v718 = vadd.f32 0.0, %v717
        %v719 = vpop.f32.mrb[0].mxu0
        %v720 = vadd.f32 0.0, %v719
        %721 = vdwg.mxu0
        %722 = vmatprep.subr.mxu0 %v210
        %723 = vmatpush1.msra.mxu0 %v209
        %724 = vmatprep.subr.mxu0 %v231
        %725 = vmatpush1.msra.mxu0 %v230
        %726 = vmatprep.subr.mxu0 %v250
        %727 = vmatpush1.msra.mxu0 %v249
        %728 = vmatprep.subr.mxu0 %v269
        %729 = vmatpush1.msra.mxu0 %v268
        %730 = vmatprep.subr.mxu0 %v288
        %731 = vmatpush1.msra.mxu0 %v287
        %732 = vmatprep.subr.mxu0 %v307
        %733 = vmatpush1.msra.mxu0 %v306
        %734 = vmatprep.subr.mxu0 %v326
        %735 = vmatpush1.msra.mxu0 %v325
        %736 = vmatprep.subr.mxu0 %v345
        %737 = vmatpush1.msra.mxu0 %v344
        %738 = vmatprep.subr.mxu0 %v364
        %739 = vmatpush1.msra.mxu0 %v363
        %740 = vmatprep.subr.mxu0 0.0
        %741 = vmatpush1.msra.mxu0 0.0
        %742 = vmatprep.subr.mxu0 0.0
        %743 = vmatpush1.msra.mxu0 0.0
        %744 = vmatprep.subr.mxu0 0.0
        %745 = vmatpush1.msra.mxu0 0.0
        %746 = vmatprep.subr.mxu0 0.0
        %747 = vmatpush1.msra.mxu0 0.0
        %748 = vmatprep.subr.mxu0 0.0
        %749 = vmatpush1.msra.mxu0 0.0
        %750 = vmatprep.subr.mxu0 0.0
        %751 = vmatpush1.msra.mxu0 0.0
        %752 = vmatprep.subr.mxu0 0.0
        %753 = vmatpush1.msra.mxu0 0.0
        %754 = vmatprep.subr.mxu0 0.0
        %755 = vmatpush1.msra.mxu0 0.0
        %756 = vmatprep.subr.mxu0 0.0
        %757 = vmatpush1.msra.mxu0 0.0
        %758 = vmatprep.subr.mxu0 0.0
        %759 = vmatpush1.msra.mxu0 0.0
        %760 = vmatprep.subr.mxu0 0.0
        %761 = vmatpush1.msra.mxu0 0.0
        %762 = vmatprep.subr.mxu0 0.0
        %763 = vmatpush1.msra.mxu0 0.0
        %764 = vmatprep.subr.mxu0 0.0
        %765 = vmatpush1.msra.mxu0 0.0
        %766 = vmatprep.subr.mxu0 0.0
        %767 = vmatpush1.msra.mxu0 0.0
        %768 = vmatprep.subr.mxu0 0.0
        %769 = vmatpush1.msra.mxu0 0.0
        %770 = vmatprep.subr.mxu0 0.0
        %771 = vmatpush1.msra.mxu0 0.0
        %772 = vmatprep.subr.mxu0 0.0
        %773 = vmatpush1.msra.mxu0 0.0
        %774 = vmatprep.subr.mxu0 0.0
        %775 = vmatpush1.msra.mxu0 0.0
        %776 = vmatprep.subr.mxu0 0.0
        %777 = vmatpush1.msra.mxu0 0.0
        %778 = vmatprep.subr.mxu0 0.0
        %779 = vmatpush1.msra.mxu0 0.0
        %780 = vmatprep.subr.mxu0 0.0
        %781 = vmatpush1.msra.mxu0 0.0
        %782 = vmatprep.subr.mxu0 0.0
        %783 = vmatpush1.msra.mxu0 0.0
        %784 = vmatprep.subr.mxu0 0.0
        %785 = vmatpush1.msra.mxu0 0.0
        %786 = vmatprep.mubr.f32.mxu0 0.0
        %787 = vmatmul.mubr.f32.gmra.mrb[0].mxu0 %v159
        %v788 = vpop.f32.mrb[0].mxu0
        %v789 = vadd.f32 0.0, %v788
        %v790 = vpop.f32.mrb[0].mxu0
        %v791 = vadd.f32 0.0, %v790
        %792 = vmatprep.mubr.f32.mxu0 0.0
        %793 = vmatmul.mubr.f32.gmra.mrb[0].mxu0 %v160
        %v794 = vpop.f32.mrb[0].mxu0
        %v795 = vadd.f32 0.0, %v794
        %v796 = vpop.f32.mrb[0].mxu0
        %v797 = vadd.f32 0.0, %v796
        %798 = vmatprep.mubr.f32.mxu0 0.0
        %799 = vmatmul.mubr.f32.gmra.mrb[0].mxu0 %v161
        %v800 = vpop.f32.mrb[0].mxu0
        %v801 = vadd.f32 0.0, %v800
        %v802 = vpop.f32.mrb[0].mxu0
        %v803 = vadd.f32 0.0, %v802
        %804 = vmatprep.mubr.f32.mxu0 0.0
        %805 = vmatmul.mubr.f32.gmra.mrb[0].mxu0 %v162
        %v806 = vpop.f32.mrb[0].mxu0
        %v807 = vadd.f32 0.0, %v806
        %v808 = vpop.f32.mrb[0].mxu0
        %v809 = vadd.f32 0.0, %v808
        %810 = vmatprep.mubr.f32.mxu0 0.0
        %811 = vmatmul.mubr.f32.gmra.mrb[0].mxu0 %v163
        %v812 = vpop.f32.mrb[0].mxu0
        %v813 = vadd.f32 0.0, %v812
        %v814 = vpop.f32.mrb[0].mxu0
        %v815 = vadd.f32 0.0, %v814
        %816 = vmatprep.mubr.f32.mxu0 0.0
        %817 = vmatmul.mubr.f32.gmra.mrb[0].mxu0 %v164
        %v818 = vpop.f32.mrb[0].mxu0
        %v819 = vadd.f32 0.0, %v818
        %v820 = vpop.f32.mrb[0].mxu0
        %v821 = vadd.f32 0.0, %v820
        %822 = vmatprep.mubr.f32.mxu0 0.0
        %823 = vmatmul.mubr.f32.gmra.mrb[0].mxu0 %v165
        %v824 = vpop.f32.mrb[0].mxu0
        %v825 = vadd.f32 0.0, %v824
        %v826 = vpop.f32.mrb[0].mxu0
        %v827 = vadd.f32 0.0, %v826
        %828 = vmatprep.mubr.f32.mxu0 0.0
        %829 = vmatmul.mubr.f32.gmra.mrb[0].mxu0 %v166
        %v830 = vpop.f32.mrb[0].mxu0
        %v831 = vadd.f32 0.0, %v830
        %v832 = vpop.f32.mrb[0].mxu0
        %v833 = vadd.f32 0.0, %v832
        %834 = vmatprep.mubr.f32.mxu0 0.0
        %835 = vmatmul.mubr.f32.gmra.mrb[0].mxu0 %v167
        %v836 = vpop.f32.mrb[0].mxu0
        %v837 = vadd.f32 0.0, %v836
        %v838 = vpop.f32.mrb[0].mxu0
        %v839 = vadd.f32 0.0, %v838
        %840 = vmatprep.mubr.f32.mxu0 0.0
        %841 = vmatmul.mubr.f32.gmra.mrb[0].mxu0 %v168
        %v842 = vpop.f32.mrb[0].mxu0
        %v843 = vadd.f32 0.0, %v842
        %v844 = vpop.f32.mrb[0].mxu0
        %v845 = vadd.f32 0.0, %v844
        %846 = vmatprep.mubr.f32.mxu0 0.0
        %847 = vmatmul.mubr.f32.gmra.mrb[0].mxu0 %v169
        %v848 = vpop.f32.mrb[0].mxu0
        %v849 = vadd.f32 0.0, %v848
        %v850 = vpop.f32.mrb[0].mxu0
        %v851 = vadd.f32 0.0, %v850
        %852 = vmatprep.mubr.f32.mxu0 0.0
        %853 = vmatmul.mubr.f32.gmra.mrb[0].mxu0 %v170
        %v854 = vpop.f32.mrb[0].mxu0
        %v855 = vadd.f32 0.0, %v854
        %v856 = vpop.f32.mrb[0].mxu0
        %v857 = vadd.f32 0.0, %v856
        %858 = vmatprep.mubr.f32.mxu0 0.0
        %859 = vmatmul.mubr.f32.gmra.mrb[0].mxu0 %v171
        %v860 = vpop.f32.mrb[0].mxu0
        %v861 = vadd.f32 0.0, %v860
        %v862 = vpop.f32.mrb[0].mxu0
        %v863 = vadd.f32 0.0, %v862
        %864 = vmatprep.mubr.f32.mxu0 0.0
        %865 = vmatmul.mubr.f32.gmra.mrb[0].mxu0 %v172
        %v866 = vpop.f32.mrb[0].mxu0
        %v867 = vadd.f32 0.0, %v866
        %v868 = vpop.f32.mrb[0].mxu0
        %v869 = vadd.f32 0.0, %v868
        %870 = vmatprep.mubr.f32.mxu0 0.0
        %871 = vmatmul.mubr.f32.gmra.mrb[0].mxu0 %v173
        %v872 = vpop.f32.mrb[0].mxu0
        %v873 = vadd.f32 0.0, %v872
        %v874 = vpop.f32.mrb[0].mxu0
        %v875 = vadd.f32 0.0, %v874
        %876 = vmatprep.mubr.f32.mxu0 0.0
        %877 = vmatmul.mubr.f32.gmra.mrb[0].mxu0 %v174
        %v878 = vpop.f32.mrb[0].mxu0
        %v879 = vadd.f32 0.0, %v878
        %v880 = vpop.f32.mrb[0].mxu0
        %v881 = vadd.f32 0.0, %v880
        %882 = vmatprep.mubr.f32.mxu0 0.0
        %883 = vmatmul.mubr.f32.gmra.mrb[0].mxu0 %v175
        %v884 = vpop.f32.mrb[0].mxu0
        %v885 = vadd.f32 0.0, %v884
        %v886 = vpop.f32.mrb[0].mxu0
        %v887 = vadd.f32 0.0, %v886
        %888 = vmatprep.mubr.f32.mxu0 0.0
        %889 = vmatmul.mubr.f32.gmra.mrb[0].mxu0 %v176
        %v890 = vpop.f32.mrb[0].mxu0
        %v891 = vadd.f32 0.0, %v890
        %v892 = vpop.f32.mrb[0].mxu0
        %v893 = vadd.f32 0.0, %v892
        %894 = vmatprep.mubr.f32.mxu0 0.0
        %895 = vmatmul.mubr.f32.gmra.mrb[0].mxu0 %v177
        %v896 = vpop.f32.mrb[0].mxu0
        %v897 = vadd.f32 0.0, %v896
        %v898 = vpop.f32.mrb[0].mxu0
        %v899 = vadd.f32 0.0, %v898
        %900 = vmatprep.mubr.f32.mxu0 0.0
        %901 = vmatmul.mubr.f32.gmra.mrb[0].mxu0 %v178
        %v902 = vpop.f32.mrb[0].mxu0
        %v903 = vadd.f32 0.0, %v902
        %v904 = vpop.f32.mrb[0].mxu0
        %v905 = vadd.f32 0.0, %v904
        %906 = vmatprep.mubr.f32.mxu0 0.0
        %907 = vmatmul.mubr.f32.gmra.mrb[0].mxu0 %v179
        %v908 = vpop.f32.mrb[0].mxu0
        %v909 = vadd.f32 0.0, %v908
        %v910 = vpop.f32.mrb[0].mxu0
        %v911 = vadd.f32 0.0, %v910
        %912 = vmatprep.mubr.f32.mxu0 0.0
        %913 = vmatmul.mubr.f32.gmra.mrb[0].mxu0 %v180
        %v914 = vpop.f32.mrb[0].mxu0
        %v915 = vadd.f32 0.0, %v914
        %v916 = vpop.f32.mrb[0].mxu0
        %v917 = vadd.f32 0.0, %v916
        %918 = vmatprep.mubr.f32.mxu0 0.0
        %919 = vmatmul.mubr.f32.gmra.mrb[0].mxu0 %v181
        %v920 = vpop.f32.mrb[0].mxu0
        %v921 = vadd.f32 0.0, %v920
        %v922 = vpop.f32.mrb[0].mxu0
        %v923 = vadd.f32 0.0, %v922
        %924 = vmatprep.mubr.f32.mxu0 0.0
        %925 = vmatmul.mubr.f32.gmra.mrb[0].mxu0 %v182
        %v926 = vpop.f32.mrb[0].mxu0
        %v927 = vadd.f32 0.0, %v926
        %v928 = vpop.f32.mrb[0].mxu0
        %v929 = vadd.f32 0.0, %v928
        %930 = vmatprep.mubr.f32.mxu0 0.0
        %931 = vmatmul.mubr.f32.gmra.mrb[0].mxu0 %v183
        %v932 = vpop.f32.mrb[0].mxu0
        %v933 = vadd.f32 0.0, %v932
        %v934 = vpop.f32.mrb[0].mxu0
        %v935 = vadd.f32 0.0, %v934
        %936 = vmatprep.mubr.f32.mxu0 0.0
        %937 = vmatmul.mubr.f32.gmra.mrb[0].mxu0 %v184
        %v938 = vpop.f32.mrb[0].mxu0
        %v939 = vadd.f32 0.0, %v938
        %v940 = vpop.f32.mrb[0].mxu0
        %v941 = vadd.f32 0.0, %v940
        %942 = vmatprep.mubr.f32.mxu0 0.0
        %943 = vmatmul.mubr.f32.gmra.mrb[0].mxu0 %v185
        %v944 = vpop.f32.mrb[0].mxu0
        %v945 = vadd.f32 0.0, %v944
        %v946 = vpop.f32.mrb[0].mxu0
        %v947 = vadd.f32 0.0, %v946
        %948 = vmatprep.mubr.f32.mxu0 0.0
        %949 = vmatmul.mubr.f32.gmra.mrb[0].mxu0 %v186
        %v950 = vpop.f32.mrb[0].mxu0
        %v951 = vadd.f32 0.0, %v950
        %v952 = vpop.f32.mrb[0].mxu0
        %v953 = vadd.f32 0.0, %v952
        %954 = vmatprep.mubr.f32.mxu0 0.0
        %955 = vmatmul.mubr.f32.gmra.mrb[0].mxu0 %v187
        %v956 = vpop.f32.mrb[0].mxu0
        %v957 = vadd.f32 0.0, %v956
        %v958 = vpop.f32.mrb[0].mxu0
        %v959 = vadd.f32 0.0, %v958
        %960 = vmatprep.mubr.f32.mxu0 0.0
        %961 = vmatmul.mubr.f32.gmra.mrb[0].mxu0 %v188
        %v962 = vpop.f32.mrb[0].mxu0
        %v963 = vadd.f32 0.0, %v962
        %v964 = vpop.f32.mrb[0].mxu0
        %v965 = vadd.f32 0.0, %v964
        %966 = vmatprep.mubr.f32.mxu0 0.0
        %967 = vmatmul.mubr.f32.gmra.mrb[0].mxu0 %v189
        %v968 = vpop.f32.mrb[0].mxu0
        %v969 = vadd.f32 0.0, %v968
        %v970 = vpop.f32.mrb[0].mxu0
        %v971 = vadd.f32 0.0, %v970
        %972 = vmatprep.mubr.f32.mxu0 0.0
        %973 = vmatmul.mubr.f32.gmra.mrb[0].mxu0 %v190
        %v974 = vpop.f32.mrb[0].mxu0
        %v975 = vadd.f32 0.0, %v974
        %v976 = vpop.f32.mrb[0].mxu0
        %v977 = vadd.f32 0.0, %v976
        %978 = vmatprep.mubr.f32.mxu0 0.0
        %979 = vmatmul.mubr.f32.gmra.mrb[0].mxu0 %v191
        %v980 = vpop.f32.mrb[0].mxu0
        %v981 = vadd.f32 0.0, %v980
        %v982 = vpop.f32.mrb[0].mxu0
        %v983 = vadd.f32 0.0, %v982
        %984 = vmatprep.mubr.f32.mxu0 0.0
        %985 = vmatmul.mubr.f32.gmra.mrb[0].mxu0 %v192
        %v986 = vpop.f32.mrb[0].mxu0
        %v987 = vadd.f32 0.0, %v986
        %v988 = vpop.f32.mrb[0].mxu0
        %v989 = vadd.f32 0.0, %v988
        %990 = vmatprep.mubr.f32.mxu0 0.0
        %991 = vmatmul.mubr.f32.gmra.mrb[0].mxu0 %v193
        %v992 = vpop.f32.mrb[0].mxu0
        %v993 = vadd.f32 0.0, %v992
        %v994 = vpop.f32.mrb[0].mxu0
        %v995 = vadd.f32 0.0, %v994
        %996 = vmatprep.mubr.f32.mxu0 0.0
        %997 = vmatmul.mubr.f32.gmra.mrb[0].mxu0 %v194
        %v998 = vpop.f32.mrb[0].mxu0
        %v999 = vadd.f32 0.0, %v998
        %v1000 = vpop.f32.mrb[0].mxu0
        %v1001 = vadd.f32 0.0, %v1000
        %1002 = vmatprep.mubr.f32.mxu0 0.0
        %1003 = vmatmul.mubr.f32.gmra.mrb[0].mxu0 %v195
        %v1004 = vpop.f32.mrb[0].mxu0
        %v1005 = vadd.f32 0.0, %v1004
        %v1006 = vpop.f32.mrb[0].mxu0
        %v1007 = vadd.f32 0.0, %v1006
        %1008 = vmatprep.mubr.f32.mxu0 0.0
        %1009 = vmatmul.mubr.f32.gmra.mrb[0].mxu0 %v196
        %v1010 = vpop.f32.mrb[0].mxu0
        %v1011 = vadd.f32 0.0, %v1010
        %v1012 = vpop.f32.mrb[0].mxu0
        %v1013 = vadd.f32 0.0, %v1012
        %1014 = vmatprep.mubr.f32.mxu0 0.0
        %1015 = vmatmul.mubr.f32.gmra.mrb[0].mxu0 %v197
        %v1016 = vpop.f32.mrb[0].mxu0
        %v1017 = vadd.f32 0.0, %v1016
        %v1018 = vpop.f32.mrb[0].mxu0
        %v1019 = vadd.f32 0.0, %v1018
        %1020 = vmatprep.mubr.f32.mxu0 0.0
        %1021 = vmatmul.mubr.f32.gmra.mrb[0].mxu0 %v198
        %v1022 = vpop.f32.mrb[0].mxu0
        %v1023 = vadd.f32 0.0, %v1022
        %v1024 = vpop.f32.mrb[0].mxu0
        %v1025 = vadd.f32 0.0, %v1024
        %1026 = vmatprep.mubr.f32.mxu0 0.0
        %1027 = vmatmul.mubr.f32.gmra.mrb[0].mxu0 %v199
        %v1028 = vpop.f32.mrb[0].mxu0
        %v1029 = vadd.f32 0.0, %v1028
        %v1030 = vpop.f32.mrb[0].mxu0
        %v1031 = vadd.f32 0.0, %v1030
        %1032 = vmatprep.mubr.f32.mxu0 0.0
        %1033 = vmatmul.mubr.f32.gmra.mrb[0].mxu0 %v200
        %v1034 = vpop.f32.mrb[0].mxu0
        %v1035 = vadd.f32 0.0, %v1034
        %v1036 = vpop.f32.mrb[0].mxu0
        %v1037 = vadd.f32 0.0, %v1036
        %1038 = vmatprep.mubr.f32.mxu0 0.0
        %1039 = vmatmul.mubr.f32.gmra.mrb[0].mxu0 %v201
        %v1040 = vpop.f32.mrb[0].mxu0
        %v1041 = vadd.f32 0.0, %v1040
        %v1042 = vpop.f32.mrb[0].mxu0
        %v1043 = vadd.f32 0.0, %v1042
        %1044 = vmatprep.mubr.f32.mxu0 0.0
        %1045 = vmatmul.mubr.f32.gmra.mrb[0].mxu0 %v202
        %v1046 = vpop.f32.mrb[0].mxu0
        %v1047 = vadd.f32 0.0, %v1046
        %v1048 = vpop.f32.mrb[0].mxu0
        %v1049 = vadd.f32 0.0, %v1048
        %1050 = vmatprep.mubr.f32.mxu0 0.0
        %1051 = vmatmul.mubr.f32.gmra.mrb[0].mxu0 %v203
        %v1052 = vpop.f32.mrb[0].mxu0
        %v1053 = vadd.f32 0.0, %v1052
        %v1054 = vpop.f32.mrb[0].mxu0
        %v1055 = vadd.f32 0.0, %v1054
        %1056 = vmatprep.mubr.f32.mxu0 0.0
        %1057 = vmatmul.mubr.f32.gmra.mrb[0].mxu0 %v204
        %v1058 = vpop.f32.mrb[0].mxu0
        %v1059 = vadd.f32 0.0, %v1058
        %v1060 = vpop.f32.mrb[0].mxu0
        %v1061 = vadd.f32 0.0, %v1060
        %1062 = vmatprep.mubr.f32.mxu0 0.0
        %1063 = vmatmul.mubr.f32.gmra.mrb[0].mxu0 %v205
        %v1064 = vpop.f32.mrb[0].mxu0
        %v1065 = vadd.f32 0.0, %v1064
        %v1066 = vpop.f32.mrb[0].mxu0
        %v1067 = vadd.f32 0.0, %v1066
        %1068 = vmatprep.mubr.f32.mxu0 0.0
        %1069 = vmatmul.mubr.f32.gmra.mrb[0].mxu0 %v206
        %v1070 = vpop.f32.mrb[0].mxu0
        %v1071 = vadd.f32 0.0, %v1070
        %v1072 = vpop.f32.mrb[0].mxu0
        %v1073 = vadd.f32 0.0, %v1072
        %1074 = vdwg.mxu0
        %vm1075 = vcmp.gt.f32.partialorder %v436, 0.0
        %vm1076 = vcmp.gt.f32.partialorder %v438, 0.0
        %vm1077 = vcmp.gt.f32.partialorder %v789, 0.0
        %vm1078 = vcmp.gt.f32.partialorder %v791, 0.0
        %vm1079 = vcmp.gt.f32.partialorder %v442, 0.0
        %vm1080 = vcmp.gt.f32.partialorder %v444, 0.0
        %vm1081 = vcmp.gt.f32.partialorder %v795, 0.0
        %vm1082 = vcmp.gt.f32.partialorder %v797, 0.0
        %vm1083 = vcmp.gt.f32.partialorder %v448, 0.0
        %vm1084 = vcmp.gt.f32.partialorder %v450, 0.0
        %vm1085 = vcmp.gt.f32.partialorder %v801, 0.0
        %vm1086 = vcmp.gt.f32.partialorder %v803, 0.0
        %vm1087 = vcmp.gt.f32.partialorder %v454, 0.0
        %vm1088 = vcmp.gt.f32.partialorder %v456, 0.0
        %vm1089 = vcmp.gt.f32.partialorder %v807, 0.0
        %vm1090 = vcmp.gt.f32.partialorder %v809, 0.0
        %vm1091 = vcmp.gt.f32.partialorder %v460, 0.0
        %vm1092 = vcmp.gt.f32.partialorder %v462, 0.0
        %vm1093 = vcmp.gt.f32.partialorder %v813, 0.0
        %vm1094 = vcmp.gt.f32.partialorder %v815, 0.0
        %vm1095 = vcmp.gt.f32.partialorder %v466, 0.0
        %vm1096 = vcmp.gt.f32.partialorder %v468, 0.0
        %vm1097 = vcmp.gt.f32.partialorder %v819, 0.0
        %vm1098 = vcmp.gt.f32.partialorder %v821, 0.0
        %vm1099 = vcmp.gt.f32.partialorder %v472, 0.0
        %vm1100 = vcmp.gt.f32.partialorder %v474, 0.0
        %vm1101 = vcmp.gt.f32.partialorder %v825, 0.0
        %vm1102 = vcmp.gt.f32.partialorder %v827, 0.0
        %vm1103 = vcmp.gt.f32.partialorder %v478, 0.0
        %vm1104 = vcmp.gt.f32.partialorder %v480, 0.0
        %vm1105 = vcmp.gt.f32.partialorder %v831, 0.0
        %vm1106 = vcmp.gt.f32.partialorder %v833, 0.0
        %vm1107 = vcmp.gt.f32.partialorder %v484, 0.0
        %vm1108 = vcmp.gt.f32.partialorder %v486, 0.0
        %vm1109 = vcmp.gt.f32.partialorder %v837, 0.0
        %vm1110 = vcmp.gt.f32.partialorder %v839, 0.0
        %vm1111 = vcmp.gt.f32.partialorder %v490, 0.0
        %vm1112 = vcmp.gt.f32.partialorder %v492, 0.0
        %vm1113 = vcmp.gt.f32.partialorder %v843, 0.0
        %vm1114 = vcmp.gt.f32.partialorder %v845, 0.0
        %vm1115 = vcmp.gt.f32.partialorder %v496, 0.0
        %vm1116 = vcmp.gt.f32.partialorder %v498, 0.0
        %vm1117 = vcmp.gt.f32.partialorder %v849, 0.0
        %vm1118 = vcmp.gt.f32.partialorder %v851, 0.0
        %vm1119 = vcmp.gt.f32.partialorder %v502, 0.0
        %vm1120 = vcmp.gt.f32.partialorder %v504, 0.0
        %vm1121 = vcmp.gt.f32.partialorder %v855, 0.0
        %vm1122 = vcmp.gt.f32.partialorder %v857, 0.0
        %vm1123 = vcmp.gt.f32.partialorder %v508, 0.0
        %vm1124 = vcmp.gt.f32.partialorder %v510, 0.0
        %vm1125 = vcmp.gt.f32.partialorder %v861, 0.0
        %vm1126 = vcmp.gt.f32.partialorder %v863, 0.0
        %vm1127 = vcmp.gt.f32.partialorder %v514, 0.0
        %vm1128 = vcmp.gt.f32.partialorder %v516, 0.0
        %vm1129 = vcmp.gt.f32.partialorder %v867, 0.0
        %vm1130 = vcmp.gt.f32.partialorder %v869, 0.0
        %vm1131 = vcmp.gt.f32.partialorder %v520, 0.0
        %vm1132 = vcmp.gt.f32.partialorder %v522, 0.0
        %vm1133 = vcmp.gt.f32.partialorder %v873, 0.0
        %vm1134 = vcmp.gt.f32.partialorder %v875, 0.0
        %vm1135 = vcmp.gt.f32.partialorder %v526, 0.0
        %vm1136 = vcmp.gt.f32.partialorder %v528, 0.0
        %vm1137 = vcmp.gt.f32.partialorder %v879, 0.0
        %vm1138 = vcmp.gt.f32.partialorder %v881, 0.0
        %vm1139 = vcmp.gt.f32.partialorder %v532, 0.0
        %vm1140 = vcmp.gt.f32.partialorder %v534, 0.0
        %vm1141 = vcmp.gt.f32.partialorder %v885, 0.0
        %vm1142 = vcmp.gt.f32.partialorder %v887, 0.0
        %vm1143 = vcmp.gt.f32.partialorder %v538, 0.0
        %vm1144 = vcmp.gt.f32.partialorder %v540, 0.0
        %vm1145 = vcmp.gt.f32.partialorder %v891, 0.0
        %vm1146 = vcmp.gt.f32.partialorder %v893, 0.0
        %vm1147 = vcmp.gt.f32.partialorder %v544, 0.0
        %vm1148 = vcmp.gt.f32.partialorder %v546, 0.0
        %vm1149 = vcmp.gt.f32.partialorder %v897, 0.0
        %vm1150 = vcmp.gt.f32.partialorder %v899, 0.0
        %vm1151 = vcmp.gt.f32.partialorder %v550, 0.0
        %vm1152 = vcmp.gt.f32.partialorder %v552, 0.0
        %vm1153 = vcmp.gt.f32.partialorder %v903, 0.0
        %vm1154 = vcmp.gt.f32.partialorder %v905, 0.0
        %vm1155 = vcmp.gt.f32.partialorder %v556, 0.0
        %vm1156 = vcmp.gt.f32.partialorder %v558, 0.0
        %vm1157 = vcmp.gt.f32.partialorder %v909, 0.0
        %vm1158 = vcmp.gt.f32.partialorder %v911, 0.0
        %vm1159 = vcmp.gt.f32.partialorder %v562, 0.0
        %vm1160 = vcmp.gt.f32.partialorder %v564, 0.0
        %vm1161 = vcmp.gt.f32.partialorder %v915, 0.0
        %vm1162 = vcmp.gt.f32.partialorder %v917, 0.0
        %vm1163 = vcmp.gt.f32.partialorder %v568, 0.0
        %vm1164 = vcmp.gt.f32.partialorder %v570, 0.0
        %vm1165 = vcmp.gt.f32.partialorder %v921, 0.0
        %vm1166 = vcmp.gt.f32.partialorder %v923, 0.0
        %vm1167 = vcmp.gt.f32.partialorder %v574, 0.0
        %vm1168 = vcmp.gt.f32.partialorder %v576, 0.0
        %vm1169 = vcmp.gt.f32.partialorder %v927, 0.0
        %vm1170 = vcmp.gt.f32.partialorder %v929, 0.0
        %vm1171 = vcmp.gt.f32.partialorder %v580, 0.0
        %vm1172 = vcmp.gt.f32.partialorder %v582, 0.0
        %vm1173 = vcmp.gt.f32.partialorder %v933, 0.0
        %vm1174 = vcmp.gt.f32.partialorder %v935, 0.0
        %vm1175 = vcmp.gt.f32.partialorder %v586, 0.0
        %vm1176 = vcmp.gt.f32.partialorder %v588, 0.0
        %vm1177 = vcmp.gt.f32.partialorder %v939, 0.0
        %vm1178 = vcmp.gt.f32.partialorder %v941, 0.0
        %vm1179 = vcmp.gt.f32.partialorder %v592, 0.0
        %vm1180 = vcmp.gt.f32.partialorder %v594, 0.0
        %vm1181 = vcmp.gt.f32.partialorder %v945, 0.0
        %vm1182 = vcmp.gt.f32.partialorder %v947, 0.0
        %vm1183 = vcmp.gt.f32.partialorder %v598, 0.0
        %vm1184 = vcmp.gt.f32.partialorder %v600, 0.0
        %vm1185 = vcmp.gt.f32.partialorder %v951, 0.0
        %vm1186 = vcmp.gt.f32.partialorder %v953, 0.0
        %vm1187 = vcmp.gt.f32.partialorder %v604, 0.0
        %vm1188 = vcmp.gt.f32.partialorder %v606, 0.0
        %vm1189 = vcmp.gt.f32.partialorder %v957, 0.0
        %vm1190 = vcmp.gt.f32.partialorder %v959, 0.0
        %vm1191 = vcmp.gt.f32.partialorder %v610, 0.0
        %vm1192 = vcmp.gt.f32.partialorder %v612, 0.0
        %vm1193 = vcmp.gt.f32.partialorder %v963, 0.0
        %vm1194 = vcmp.gt.f32.partialorder %v965, 0.0
        %vm1195 = vcmp.gt.f32.partialorder %v616, 0.0
        %vm1196 = vcmp.gt.f32.partialorder %v618, 0.0
        %vm1197 = vcmp.gt.f32.partialorder %v969, 0.0
        %vm1198 = vcmp.gt.f32.partialorder %v971, 0.0
        %vm1199 = vcmp.gt.f32.partialorder %v622, 0.0
        %vm1200 = vcmp.gt.f32.partialorder %v624, 0.0
        %vm1201 = vcmp.gt.f32.partialorder %v975, 0.0
        %vm1202 = vcmp.gt.f32.partialorder %v977, 0.0
        %vm1203 = vcmp.gt.f32.partialorder %v628, 0.0
        %vm1204 = vcmp.gt.f32.partialorder %v630, 0.0
        %vm1205 = vcmp.gt.f32.partialorder %v981, 0.0
        %vm1206 = vcmp.gt.f32.partialorder %v983, 0.0
        %vm1207 = vcmp.gt.f32.partialorder %v634, 0.0
        %vm1208 = vcmp.gt.f32.partialorder %v636, 0.0
        %vm1209 = vcmp.gt.f32.partialorder %v987, 0.0
        %vm1210 = vcmp.gt.f32.partialorder %v989, 0.0
        %vm1211 = vcmp.gt.f32.partialorder %v640, 0.0
        %vm1212 = vcmp.gt.f32.partialorder %v642, 0.0
        %vm1213 = vcmp.gt.f32.partialorder %v993, 0.0
        %vm1214 = vcmp.gt.f32.partialorder %v995, 0.0
        %vm1215 = vcmp.gt.f32.partialorder %v646, 0.0
        %vm1216 = vcmp.gt.f32.partialorder %v648, 0.0
        %vm1217 = vcmp.gt.f32.partialorder %v999, 0.0
        %vm1218 = vcmp.gt.f32.partialorder %v1001, 0.0
        %vm1219 = vcmp.gt.f32.partialorder %v652, 0.0
        %vm1220 = vcmp.gt.f32.partialorder %v654, 0.0
        %vm1221 = vcmp.gt.f32.partialorder %v1005, 0.0
        %vm1222 = vcmp.gt.f32.partialorder %v1007, 0.0
        %vm1223 = vcmp.gt.f32.partialorder %v658, 0.0
        %vm1224 = vcmp.gt.f32.partialorder %v660, 0.0
        %vm1225 = vcmp.gt.f32.partialorder %v1011, 0.0
        %vm1226 = vcmp.gt.f32.partialorder %v1013, 0.0
        %vm1227 = vcmp.gt.f32.partialorder %v664, 0.0
        %vm1228 = vcmp.gt.f32.partialorder %v666, 0.0
        %vm1229 = vcmp.gt.f32.partialorder %v1017, 0.0
        %vm1230 = vcmp.gt.f32.partialorder %v1019, 0.0
        %vm1231 = vcmp.gt.f32.partialorder %v670, 0.0
        %vm1232 = vcmp.gt.f32.partialorder %v672, 0.0
        %vm1233 = vcmp.gt.f32.partialorder %v1023, 0.0
        %vm1234 = vcmp.gt.f32.partialorder %v1025, 0.0
        %vm1235 = vcmp.gt.f32.partialorder %v676, 0.0
        %vm1236 = vcmp.gt.f32.partialorder %v678, 0.0
        %vm1237 = vcmp.gt.f32.partialorder %v1029, 0.0
        %vm1238 = vcmp.gt.f32.partialorder %v1031, 0.0
        %vm1239 = vcmp.gt.f32.partialorder %v682, 0.0
        %vm1240 = vcmp.gt.f32.partialorder %v684, 0.0
        %vm1241 = vcmp.gt.f32.partialorder %v1035, 0.0
        %vm1242 = vcmp.gt.f32.partialorder %v1037, 0.0
        %vm1243 = vcmp.gt.f32.partialorder %v688, 0.0
        %vm1244 = vcmp.gt.f32.partialorder %v690, 0.0
        %vm1245 = vcmp.gt.f32.partialorder %v1041, 0.0
        %vm1246 = vcmp.gt.f32.partialorder %v1043, 0.0
        %vm1247 = vcmp.gt.f32.partialorder %v694, 0.0
        %vm1248 = vcmp.gt.f32.partialorder %v696, 0.0
        %vm1249 = vcmp.gt.f32.partialorder %v1047, 0.0
        %vm1250 = vcmp.gt.f32.partialorder %v1049, 0.0
        %vm1251 = vcmp.gt.f32.partialorder %v700, 0.0
        %vm1252 = vcmp.gt.f32.partialorder %v702, 0.0
        %vm1253 = vcmp.gt.f32.partialorder %v1053, 0.0
        %vm1254 = vcmp.gt.f32.partialorder %v1055, 0.0
        %vm1255 = vcmp.gt.f32.partialorder %v706, 0.0
        %vm1256 = vcmp.gt.f32.partialorder %v708, 0.0
        %vm1257 = vcmp.gt.f32.partialorder %v1059, 0.0
        %vm1258 = vcmp.gt.f32.partialorder %v1061, 0.0
        %vm1259 = vcmp.gt.f32.partialorder %v712, 0.0
        %vm1260 = vcmp.gt.f32.partialorder %v714, 0.0
        %vm1261 = vcmp.gt.f32.partialorder %v1065, 0.0
        %vm1262 = vcmp.gt.f32.partialorder %v1067, 0.0
        %vm1263 = vcmp.gt.f32.partialorder %v718, 0.0
        %vm1264 = vcmp.gt.f32.partialorder %v720, 0.0
        %vm1265 = vcmp.gt.f32.partialorder %v1071, 0.0
        %vm1266 = vcmp.gt.f32.partialorder %v1073, 0.0
        %v1267 = vmul.f32 %v436, 3.786769
        %v1268 = vmul.f32 %v438, 3.786769
        %v1269 = vmul.f32 %v789, 3.786769
        %v1270 = vmul.f32 %v791, 3.786769
        %v1271 = vmul.f32 %v442, 3.786769
        %v1272 = vmul.f32 %v444, 3.786769
        %v1273 = vmul.f32 %v795, 3.786769
        %v1274 = vmul.f32 %v797, 3.786769
        %v1275 = vmul.f32 %v448, 3.786769
        %v1276 = vmul.f32 %v450, 3.786769
        %v1277 = vmul.f32 %v801, 3.786769
        %v1278 = vmul.f32 %v803, 3.786769
        %v1279 = vmul.f32 %v454, 3.786769
        %v1280 = vmul.f32 %v456, 3.786769
        %v1281 = vmul.f32 %v807, 3.786769
        %v1282 = vmul.f32 %v809, 3.786769
        %v1283 = vmul.f32 %v460, 3.786769
        %v1284 = vmul.f32 %v462, 3.786769
        %v1285 = vmul.f32 %v813, 3.786769
        %v1286 = vmul.f32 %v815, 3.786769
        %v1287 = vmul.f32 %v466, 3.786769
        %v1288 = vmul.f32 %v468, 3.786769
        %v1289 = vmul.f32 %v819, 3.786769
        %v1290 = vmul.f32 %v821, 3.786769
        %v1291 = vmul.f32 %v472, 3.786769
        %v1292 = vmul.f32 %v474, 3.786769
        %v1293 = vmul.f32 %v825, 3.786769
        %v1294 = vmul.f32 %v827, 3.786769
        %v1295 = vmul.f32 %v478, 3.786769
        %v1296 = vmul.f32 %v480, 3.786769
        %v1297 = vmul.f32 %v831, 3.786769
        %v1298 = vmul.f32 %v833, 3.786769
        %v1299 = vmul.f32 %v484, 3.786769
        %v1300 = vmul.f32 %v486, 3.786769
        %v1301 = vmul.f32 %v837, 3.786769
        %v1302 = vmul.f32 %v839, 3.786769
        %v1303 = vmul.f32 %v490, 3.786769
        %v1304 = vmul.f32 %v492, 3.786769
        %v1305 = vmul.f32 %v843, 3.786769
        %v1306 = vmul.f32 %v845, 3.786769
        %v1307 = vmul.f32 %v496, 3.786769
        %v1308 = vmul.f32 %v498, 3.786769
        %v1309 = vmul.f32 %v849, 3.786769
        %v1310 = vmul.f32 %v851, 3.786769
        %v1311 = vmul.f32 %v502, 3.786769
        %v1312 = vmul.f32 %v504, 3.786769
        %v1313 = vmul.f32 %v855, 3.786769
        %v1314 = vmul.f32 %v857, 3.786769
        %v1315 = vmul.f32 %v508, 3.786769
        %v1316 = vmul.f32 %v510, 3.786769
        %v1317 = vmul.f32 %v861, 3.786769
        %v1318 = vmul.f32 %v863, 3.786769
        %v1319 = vmul.f32 %v514, 3.786769
        %v1320 = vmul.f32 %v516, 3.786769
        %v1321 = vmul.f32 %v867, 3.786769
        %v1322 = vmul.f32 %v869, 3.786769
        %v1323 = vmul.f32 %v520, 3.786769
        %v1324 = vmul.f32 %v522, 3.786769
        %v1325 = vmul.f32 %v873, 3.786769
        %v1326 = vmul.f32 %v875, 3.786769
        %v1327 = vmul.f32 %v526, 3.786769
        %v1328 = vmul.f32 %v528, 3.786769
        %v1329 = vmul.f32 %v879, 3.786769
        %v1330 = vmul.f32 %v881, 3.786769
        %v1331 = vmul.f32 %v532, 3.786769
        %v1332 = vmul.f32 %v534, 3.786769
        %v1333 = vmul.f32 %v885, 3.786769
        %v1334 = vmul.f32 %v887, 3.786769
        %v1335 = vmul.f32 %v538, 3.786769
        %v1336 = vmul.f32 %v540, 3.786769
        %v1337 = vmul.f32 %v891, 3.786769
        %v1338 = vmul.f32 %v893, 3.786769
        %v1339 = vmul.f32 %v544, 3.786769
        %v1340 = vmul.f32 %v546, 3.786769
        %v1341 = vmul.f32 %v897, 3.786769
        %v1342 = vmul.f32 %v899, 3.786769
        %v1343 = vmul.f32 %v550, 3.786769
        %v1344 = vmul.f32 %v552, 3.786769
        %v1345 = vmul.f32 %v903, 3.786769
        %v1346 = vmul.f32 %v905, 3.786769
        %v1347 = vmul.f32 %v556, 3.786769
        %v1348 = vmul.f32 %v558, 3.786769
        %v1349 = vmul.f32 %v909, 3.786769
        %v1350 = vmul.f32 %v911, 3.786769
        %v1351 = vmul.f32 %v562, 3.786769
        %v1352 = vmul.f32 %v564, 3.786769
        %v1353 = vmul.f32 %v915, 3.786769
        %v1354 = vmul.f32 %v917, 3.786769
        %v1355 = vmul.f32 %v568, 3.786769
        %v1356 = vmul.f32 %v570, 3.786769
        %v1357 = vmul.f32 %v921, 3.786769
        %v1358 = vmul.f32 %v923, 3.786769
        %v1359 = vmul.f32 %v574, 3.786769
        %v1360 = vmul.f32 %v576, 3.786769
        %v1361 = vmul.f32 %v927, 3.786769
        %v1362 = vmul.f32 %v929, 3.786769
        %v1363 = vmul.f32 %v580, 3.786769
        %v1364 = vmul.f32 %v582, 3.786769
        %v1365 = vmul.f32 %v933, 3.786769
        %v1366 = vmul.f32 %v935, 3.786769
        %v1367 = vmul.f32 %v586, 3.786769
        %v1368 = vmul.f32 %v588, 3.786769
        %v1369 = vmul.f32 %v939, 3.786769
        %v1370 = vmul.f32 %v941, 3.786769
        %v1371 = vmul.f32 %v592, 3.786769
        %v1372 = vmul.f32 %v594, 3.786769
        %v1373 = vmul.f32 %v945, 3.786769
        %v1374 = vmul.f32 %v947, 3.786769
        %v1375 = vmul.f32 %v598, 3.786769
        %v1376 = vmul.f32 %v600, 3.786769
        %v1377 = vmul.f32 %v951, 3.786769
        %v1378 = vmul.f32 %v953, 3.786769
        %v1379 = vmul.f32 %v604, 3.786769
        %v1380 = vmul.f32 %v606, 3.786769
        %v1381 = vmul.f32 %v957, 3.786769
        %v1382 = vmul.f32 %v959, 3.786769
        %v1383 = vmul.f32 %v610, 3.786769
        %v1384 = vmul.f32 %v612, 3.786769
        %v1385 = vmul.f32 %v963, 3.786769
        %v1386 = vmul.f32 %v965, 3.786769
        %v1387 = vmul.f32 %v616, 3.786769
        %v1388 = vmul.f32 %v618, 3.786769
        %v1389 = vmul.f32 %v969, 3.786769
        %v1390 = vmul.f32 %v971, 3.786769
        %v1391 = vmul.f32 %v622, 3.786769
        %v1392 = vmul.f32 %v624, 3.786769
        %v1393 = vmul.f32 %v975, 3.786769
        %v1394 = vmul.f32 %v977, 3.786769
        %v1395 = vmul.f32 %v628, 3.786769
        %v1396 = vmul.f32 %v630, 3.786769
        %v1397 = vmul.f32 %v981, 3.786769
        %v1398 = vmul.f32 %v983, 3.786769
        %v1399 = vmul.f32 %v634, 3.786769
        %v1400 = vmul.f32 %v636, 3.786769
        %v1401 = vmul.f32 %v987, 3.786769
        %v1402 = vmul.f32 %v989, 3.786769
        %v1403 = vmul.f32 %v640, 3.786769
        %v1404 = vmul.f32 %v642, 3.786769
        %v1405 = vmul.f32 %v993, 3.786769
        %v1406 = vmul.f32 %v995, 3.786769
        %v1407 = vmul.f32 %v646, 3.786769
        %v1408 = vmul.f32 %v648, 3.786769
        %v1409 = vmul.f32 %v999, 3.786769
        %v1410 = vmul.f32 %v1001, 3.786769
        %v1411 = vmul.f32 %v652, 3.786769
        %v1412 = vmul.f32 %v654, 3.786769
        %v1413 = vmul.f32 %v1005, 3.786769
        %v1414 = vmul.f32 %v1007, 3.786769
        %v1415 = vmul.f32 %v658, 3.786769
        %v1416 = vmul.f32 %v660, 3.786769
        %v1417 = vmul.f32 %v1011, 3.786769
        %v1418 = vmul.f32 %v1013, 3.786769
        %v1419 = vmul.f32 %v664, 3.786769
        %v1420 = vmul.f32 %v666, 3.786769
        %v1421 = vmul.f32 %v1017, 3.786769
        %v1422 = vmul.f32 %v1019, 3.786769
        %v1423 = vmul.f32 %v670, 3.786769
        %v1424 = vmul.f32 %v672, 3.786769
        %v1425 = vmul.f32 %v1023, 3.786769
        %v1426 = vmul.f32 %v1025, 3.786769
        %v1427 = vmul.f32 %v676, 3.786769
        %v1428 = vmul.f32 %v678, 3.786769
        %v1429 = vmul.f32 %v1029, 3.786769
        %v1430 = vmul.f32 %v1031, 3.786769
        %v1431 = vmul.f32 %v682, 3.786769
        %v1432 = vmul.f32 %v684, 3.786769
        %v1433 = vmul.f32 %v1035, 3.786769
        %v1434 = vmul.f32 %v1037, 3.786769
        %v1435 = vmul.f32 %v688, 3.786769
        %v1436 = vmul.f32 %v690, 3.786769
        %v1437 = vmul.f32 %v1041, 3.786769
        %v1438 = vmul.f32 %v1043, 3.786769
        %v1439 = vmul.f32 %v694, 3.786769
        %v1440 = vmul.f32 %v696, 3.786769
        %v1441 = vmul.f32 %v1047, 3.786769
        %v1442 = vmul.f32 %v1049, 3.786769
        %v1443 = vmul.f32 %v700, 3.786769
        %v1444 = vmul.f32 %v702, 3.786769
        %v1445 = vmul.f32 %v1053, 3.786769
        %v1446 = vmul.f32 %v1055, 3.786769
        %v1447 = vmul.f32 %v706, 3.786769
        %v1448 = vmul.f32 %v708, 3.786769
        %v1449 = vmul.f32 %v1059, 3.786769
        %v1450 = vmul.f32 %v1061, 3.786769
        %v1451 = vmul.f32 %v712, 3.786769
        %v1452 = vmul.f32 %v714, 3.786769
        %v1453 = vmul.f32 %v1065, 3.786769
        %v1454 = vmul.f32 %v1067, 3.786769
        %v1455 = vmul.f32 %v718, 3.786769
        %v1456 = vmul.f32 %v720, 3.786769
        %v1457 = vmul.f32 %v1071, 3.786769
        %v1458 = vmul.f32 %v1073, 3.786769
        %v1459 = vsel %vm1075, %v436, %v1267
        %v1460 = vsel %vm1076, %v438, %v1268
        %v1461 = vsel %vm1077, %v789, %v1269
        %v1462 = vsel %vm1078, %v791, %v1270
        %v1463 = vsel %vm1079, %v442, %v1271
        %v1464 = vsel %vm1080, %v444, %v1272
        %v1465 = vsel %vm1081, %v795, %v1273
        %v1466 = vsel %vm1082, %v797, %v1274
        %v1467 = vsel %vm1083, %v448, %v1275
        %v1468 = vsel %vm1084, %v450, %v1276
        %v1469 = vsel %vm1085, %v801, %v1277
        %v1470 = vsel %vm1086, %v803, %v1278
        %v1471 = vsel %vm1087, %v454, %v1279
        %v1472 = vsel %vm1088, %v456, %v1280
        %v1473 = vsel %vm1089, %v807, %v1281
        %v1474 = vsel %vm1090, %v809, %v1282
        %v1475 = vsel %vm1091, %v460, %v1283
        %v1476 = vsel %vm1092, %v462, %v1284
        %v1477 = vsel %vm1093, %v813, %v1285
        %v1478 = vsel %vm1094, %v815, %v1286
        %v1479 = vsel %vm1095, %v466, %v1287
        %v1480 = vsel %vm1096, %v468, %v1288
        %v1481 = vsel %vm1097, %v819, %v1289
        %v1482 = vsel %vm1098, %v821, %v1290
        %v1483 = vsel %vm1099, %v472, %v1291
        %v1484 = vsel %vm1100, %v474, %v1292
        %v1485 = vsel %vm1101, %v825, %v1293
        %v1486 = vsel %vm1102, %v827, %v1294
        %v1487 = vsel %vm1103, %v478, %v1295
        %v1488 = vsel %vm1104, %v480, %v1296
        %v1489 = vsel %vm1105, %v831, %v1297
        %v1490 = vsel %vm1106, %v833, %v1298
        %v1491 = vsel %vm1107, %v484, %v1299
        %v1492 = vsel %vm1108, %v486, %v1300
        %v1493 = vsel %vm1109, %v837, %v1301
        %v1494 = vsel %vm1110, %v839, %v1302
        %v1495 = vsel %vm1111, %v490, %v1303
        %v1496 = vsel %vm1112, %v492, %v1304
        %v1497 = vsel %vm1113, %v843, %v1305
        %v1498 = vsel %vm1114, %v845, %v1306
        %v1499 = vsel %vm1115, %v496, %v1307
        %v1500 = vsel %vm1116, %v498, %v1308
        %v1501 = vsel %vm1117, %v849, %v1309
        %v1502 = vsel %vm1118, %v851, %v1310
        %v1503 = vsel %vm1119, %v502, %v1311
        %v1504 = vsel %vm1120, %v504, %v1312
        %v1505 = vsel %vm1121, %v855, %v1313
        %v1506 = vsel %vm1122, %v857, %v1314
        %v1507 = vsel %vm1123, %v508, %v1315
        %v1508 = vsel %vm1124, %v510, %v1316
        %v1509 = vsel %vm1125, %v861, %v1317
        %v1510 = vsel %vm1126, %v863, %v1318
        %v1511 = vsel %vm1127, %v514, %v1319
        %v1512 = vsel %vm1128, %v516, %v1320
        %v1513 = vsel %vm1129, %v867, %v1321
        %v1514 = vsel %vm1130, %v869, %v1322
        %v1515 = vsel %vm1131, %v520, %v1323
        %v1516 = vsel %vm1132, %v522, %v1324
        %v1517 = vsel %vm1133, %v873, %v1325
        %v1518 = vsel %vm1134, %v875, %v1326
        %v1519 = vsel %vm1135, %v526, %v1327
        %v1520 = vsel %vm1136, %v528, %v1328
        %v1521 = vsel %vm1137, %v879, %v1329
        %v1522 = vsel %vm1138, %v881, %v1330
        %v1523 = vsel %vm1139, %v532, %v1331
        %v1524 = vsel %vm1140, %v534, %v1332
        %v1525 = vsel %vm1141, %v885, %v1333
        %v1526 = vsel %vm1142, %v887, %v1334
        %v1527 = vsel %vm1143, %v538, %v1335
        %v1528 = vsel %vm1144, %v540, %v1336
        %v1529 = vsel %vm1145, %v891, %v1337
        %v1530 = vsel %vm1146, %v893, %v1338
        %v1531 = vsel %vm1147, %v544, %v1339
        %v1532 = vsel %vm1148, %v546, %v1340
        %v1533 = vsel %vm1149, %v897, %v1341
        %v1534 = vsel %vm1150, %v899, %v1342
        %v1535 = vsel %vm1151, %v550, %v1343
        %v1536 = vsel %vm1152, %v552, %v1344
        %v1537 = vsel %vm1153, %v903, %v1345
        %v1538 = vsel %vm1154, %v905, %v1346
        %v1539 = vsel %vm1155, %v556, %v1347
        %v1540 = vsel %vm1156, %v558, %v1348
        %v1541 = vsel %vm1157, %v909, %v1349
        %v1542 = vsel %vm1158, %v911, %v1350
        %v1543 = vsel %vm1159, %v562, %v1351
        %v1544 = vsel %vm1160, %v564, %v1352
        %v1545 = vsel %vm1161, %v915, %v1353
        %v1546 = vsel %vm1162, %v917, %v1354
        %v1547 = vsel %vm1163, %v568, %v1355
        %v1548 = vsel %vm1164, %v570, %v1356
        %v1549 = vsel %vm1165, %v921, %v1357
        %v1550 = vsel %vm1166, %v923, %v1358
        %v1551 = vsel %vm1167, %v574, %v1359
        %v1552 = vsel %vm1168, %v576, %v1360
        %v1553 = vsel %vm1169, %v927, %v1361
        %v1554 = vsel %vm1170, %v929, %v1362
        %v1555 = vsel %vm1171, %v580, %v1363
        %v1556 = vsel %vm1172, %v582, %v1364
        %v1557 = vsel %vm1173, %v933, %v1365
        %v1558 = vsel %vm1174, %v935, %v1366
        %v1559 = vsel %vm1175, %v586, %v1367
        %v1560 = vsel %vm1176, %v588, %v1368
        %v1561 = vsel %vm1177, %v939, %v1369
        %v1562 = vsel %vm1178, %v941, %v1370
        %v1563 = vsel %vm1179, %v592, %v1371
        %v1564 = vsel %vm1180, %v594, %v1372
        %v1565 = vsel %vm1181, %v945, %v1373
        %v1566 = vsel %vm1182, %v947, %v1374
        %v1567 = vsel %vm1183, %v598, %v1375
        %v1568 = vsel %vm1184, %v600, %v1376
        %v1569 = vsel %vm1185, %v951, %v1377
        %v1570 = vsel %vm1186, %v953, %v1378
        %v1571 = vsel %vm1187, %v604, %v1379
        %v1572 = vsel %vm1188, %v606, %v1380
        %v1573 = vsel %vm1189, %v957, %v1381
        %v1574 = vsel %vm1190, %v959, %v1382
        %v1575 = vsel %vm1191, %v610, %v1383
        %v1576 = vsel %vm1192, %v612, %v1384
        %v1577 = vsel %vm1193, %v963, %v1385
        %v1578 = vsel %vm1194, %v965, %v1386
        %v1579 = vsel %vm1195, %v616, %v1387
        %v1580 = vsel %vm1196, %v618, %v1388
        %v1581 = vsel %vm1197, %v969, %v1389
        %v1582 = vsel %vm1198, %v971, %v1390
        %v1583 = vsel %vm1199, %v622, %v1391
        %v1584 = vsel %vm1200, %v624, %v1392
        %v1585 = vsel %vm1201, %v975, %v1393
        %v1586 = vsel %vm1202, %v977, %v1394
        %v1587 = vsel %vm1203, %v628, %v1395
        %v1588 = vsel %vm1204, %v630, %v1396
        %v1589 = vsel %vm1205, %v981, %v1397
        %v1590 = vsel %vm1206, %v983, %v1398
        %v1591 = vsel %vm1207, %v634, %v1399
        %v1592 = vsel %vm1208, %v636, %v1400
        %v1593 = vsel %vm1209, %v987, %v1401
        %v1594 = vsel %vm1210, %v989, %v1402
        %v1595 = vsel %vm1211, %v640, %v1403
        %v1596 = vsel %vm1212, %v642, %v1404
        %v1597 = vsel %vm1213, %v993, %v1405
        %v1598 = vsel %vm1214, %v995, %v1406
        %v1599 = vsel %vm1215, %v646, %v1407
        %v1600 = vsel %vm1216, %v648, %v1408
        %v1601 = vsel %vm1217, %v999, %v1409
        %v1602 = vsel %vm1218, %v1001, %v1410
        %v1603 = vsel %vm1219, %v652, %v1411
        %v1604 = vsel %vm1220, %v654, %v1412
        %v1605 = vsel %vm1221, %v1005, %v1413
        %v1606 = vsel %vm1222, %v1007, %v1414
        %v1607 = vsel %vm1223, %v658, %v1415
        %v1608 = vsel %vm1224, %v660, %v1416
        %v1609 = vsel %vm1225, %v1011, %v1417
        %v1610 = vsel %vm1226, %v1013, %v1418
        %v1611 = vsel %vm1227, %v664, %v1419
        %v1612 = vsel %vm1228, %v666, %v1420
        %v1613 = vsel %vm1229, %v1017, %v1421
        %v1614 = vsel %vm1230, %v1019, %v1422
        %v1615 = vsel %vm1231, %v670, %v1423
        %v1616 = vsel %vm1232, %v672, %v1424
        %v1617 = vsel %vm1233, %v1023, %v1425
        %v1618 = vsel %vm1234, %v1025, %v1426
        %v1619 = vsel %vm1235, %v676, %v1427
        %v1620 = vsel %vm1236, %v678, %v1428
        %v1621 = vsel %vm1237, %v1029, %v1429
        %v1622 = vsel %vm1238, %v1031, %v1430
        %v1623 = vsel %vm1239, %v682, %v1431
        %v1624 = vsel %vm1240, %v684, %v1432
        %v1625 = vsel %vm1241, %v1035, %v1433
        %v1626 = vsel %vm1242, %v1037, %v1434
        %v1627 = vsel %vm1243, %v688, %v1435
        %v1628 = vsel %vm1244, %v690, %v1436
        %v1629 = vsel %vm1245, %v1041, %v1437
        %v1630 = vsel %vm1246, %v1043, %v1438
        %v1631 = vsel %vm1247, %v694, %v1439
        %v1632 = vsel %vm1248, %v696, %v1440
        %v1633 = vsel %vm1249, %v1047, %v1441
        %v1634 = vsel %vm1250, %v1049, %v1442
        %v1635 = vsel %vm1251, %v700, %v1443
        %v1636 = vsel %vm1252, %v702, %v1444
        %v1637 = vsel %vm1253, %v1053, %v1445
        %v1638 = vsel %vm1254, %v1055, %v1446
        %v1639 = vsel %vm1255, %v706, %v1447
        %v1640 = vsel %vm1256, %v708, %v1448
        %v1641 = vsel %vm1257, %v1059, %v1449
        %v1642 = vsel %vm1258, %v1061, %v1450
        %v1643 = vsel %vm1259, %v712, %v1451
        %v1644 = vsel %vm1260, %v714, %v1452
        %v1645 = vsel %vm1261, %v1065, %v1453
        %v1646 = vsel %vm1262, %v1067, %v1454
        %v1647 = vsel %vm1263, %v718, %v1455
        %v1648 = vsel %vm1264, %v720, %v1456
        %v1649 = vsel %vm1265, %v1071, %v1457
        %v1650 = vsel %vm1266, %v1073, %v1458
        %1651 = vst [vmem:[%s158] sm:$0xff] %v1459
        %1652 = vst [vmem:[%s158 + $0x8] sm:$0xff] %v1460
        %1653 = vst [vmem:[%s158 + $0x10] sm:$0xff] %v1461
        %1654 = vst [vmem:[%s158 + $0x18] sm:$0xff] %v1462
        %1655 = vst [vmem:[%s158 + $0x20] sm:$0xff] %v1463
        %1656 = vst [vmem:[%s158 + $0x28] sm:$0xff] %v1464
        %1657 = vst [vmem:[%s158 + $0x30] sm:$0xff] %v1465
        %1658 = vst [vmem:[%s158 + $0x38] sm:$0xff] %v1466
        %1659 = vst [vmem:[%s158 + $0x40] sm:$0xff] %v1467
        %1660 = vst [vmem:[%s158 + $0x48] sm:$0xff] %v1468
        %1661 = vst [vmem:[%s158 + $0x50] sm:$0xff] %v1469
        %1662 = vst [vmem:[%s158 + $0x58] sm:$0xff] %v1470
        %1663 = vst [vmem:[%s158 + $0x60] sm:$0xff] %v1471
        %1664 = vst [vmem:[%s158 + $0x68] sm:$0xff] %v1472
        %1665 = vst [vmem:[%s158 + $0x70] sm:$0xff] %v1473
        %1666 = vst [vmem:[%s158 + $0x78] sm:$0xff] %v1474
        %1667 = vst [vmem:[%s158 + $0x80] sm:$0xff] %v1475
        %1668 = vst [vmem:[%s158 + $0x88] sm:$0xff] %v1476
        %1669 = vst [vmem:[%s158 + $0x90] sm:$0xff] %v1477
        %1670 = vst [vmem:[%s158 + $0x98] sm:$0xff] %v1478
        %1671 = vst [vmem:[%s158 + $0xa0] sm:$0xff] %v1479
        %1672 = vst [vmem:[%s158 + $0xa8] sm:$0xff] %v1480
        %1673 = vst [vmem:[%s158 + $0xb0] sm:$0xff] %v1481
        %1674 = vst [vmem:[%s158 + $0xb8] sm:$0xff] %v1482
        %1675 = vst [vmem:[%s158 + $0xc0] sm:$0xff] %v1483
        %1676 = vst [vmem:[%s158 + $0xc8] sm:$0xff] %v1484
        %1677 = vst [vmem:[%s158 + $0xd0] sm:$0xff] %v1485
        %1678 = vst [vmem:[%s158 + $0xd8] sm:$0xff] %v1486
        %1679 = vst [vmem:[%s158 + $0xe0] sm:$0xff] %v1487
        %1680 = vst [vmem:[%s158 + $0xe8] sm:$0xff] %v1488
        %1681 = vst [vmem:[%s158 + $0xf0] sm:$0xff] %v1489
        %1682 = vst [vmem:[%s158 + $0xf8] sm:$0xff] %v1490
        %1683 = vst [vmem:[%s158 + $0x100] sm:$0xff] %v1491
        %1684 = vst [vmem:[%s158 + $0x108] sm:$0xff] %v1492
        %1685 = vst [vmem:[%s158 + $0x110] sm:$0xff] %v1493
        %1686 = vst [vmem:[%s158 + $0x118] sm:$0xff] %v1494
        %1687 = vst [vmem:[%s158 + $0x120] sm:$0xff] %v1495
        %1688 = vst [vmem:[%s158 + $0x128] sm:$0xff] %v1496
        %1689 = vst [vmem:[%s158 + $0x130] sm:$0xff] %v1497
        %1690 = vst [vmem:[%s158 + $0x138] sm:$0xff] %v1498
        %1691 = vst [vmem:[%s158 + $0x140] sm:$0xff] %v1499
        %1692 = vst [vmem:[%s158 + $0x148] sm:$0xff] %v1500
        %1693 = vst [vmem:[%s158 + $0x150] sm:$0xff] %v1501
        %1694 = vst [vmem:[%s158 + $0x158] sm:$0xff] %v1502
        %1695 = vst [vmem:[%s158 + $0x160] sm:$0xff] %v1503
        %1696 = vst [vmem:[%s158 + $0x168] sm:$0xff] %v1504
        %1697 = vst [vmem:[%s158 + $0x170] sm:$0xff] %v1505
        %1698 = vst [vmem:[%s158 + $0x178] sm:$0xff] %v1506
        %1699 = vst [vmem:[%s158 + $0x180] sm:$0xff] %v1507
        %1700 = vst [vmem:[%s158 + $0x188] sm:$0xff] %v1508
        %1701 = vst [vmem:[%s158 + $0x190] sm:$0xff] %v1509
        %1702 = vst [vmem:[%s158 + $0x198] sm:$0xff] %v1510
        %1703 = vst [vmem:[%s158 + $0x1a0] sm:$0xff] %v1511
        %1704 = vst [vmem:[%s158 + $0x1a8] sm:$0xff] %v1512
        %1705 = vst [vmem:[%s158 + $0x1b0] sm:$0xff] %v1513
        %1706 = vst [vmem:[%s158 + $0x1b8] sm:$0xff] %v1514
        %1707 = vst [vmem:[%s158 + $0x1c0] sm:$0xff] %v1515
        %1708 = vst [vmem:[%s158 + $0x1c8] sm:$0xff] %v1516
        %1709 = vst [vmem:[%s158 + $0x1d0] sm:$0xff] %v1517
        %1710 = vst [vmem:[%s158 + $0x1d8] sm:$0xff] %v1518
        %1711 = vst [vmem:[%s158 + $0x1e0] sm:$0xff] %v1519
        %1712 = vst [vmem:[%s158 + $0x1e8] sm:$0xff] %v1520
        %1713 = vst [vmem:[%s158 + $0x1f0] sm:$0xff] %v1521
        %1714 = vst [vmem:[%s158 + $0x1f8] sm:$0xff] %v1522
        %1715 = vst [vmem:[%s158 + $0x200] sm:$0xff] %v1523
        %1716 = vst [vmem:[%s158 + $0x208] sm:$0xff] %v1524
        %1717 = vst [vmem:[%s158 + $0x210] sm:$0xff] %v1525
        %1718 = vst [vmem:[%s158 + $0x218] sm:$0xff] %v1526
        %1719 = vst [vmem:[%s158 + $0x220] sm:$0xff] %v1527
        %1720 = vst [vmem:[%s158 + $0x228] sm:$0xff] %v1528
        %1721 = vst [vmem:[%s158 + $0x230] sm:$0xff] %v1529
        %1722 = vst [vmem:[%s158 + $0x238] sm:$0xff] %v1530
        %1723 = vst [vmem:[%s158 + $0x240] sm:$0xff] %v1531
        %1724 = vst [vmem:[%s158 + $0x248] sm:$0xff] %v1532
        %1725 = vst [vmem:[%s158 + $0x250] sm:$0xff] %v1533
        %1726 = vst [vmem:[%s158 + $0x258] sm:$0xff] %v1534
        %1727 = vst [vmem:[%s158 + $0x260] sm:$0xff] %v1535
        %1728 = vst [vmem:[%s158 + $0x268] sm:$0xff] %v1536
        %1729 = vst [vmem:[%s158 + $0x270] sm:$0xff] %v1537
        %1730 = vst [vmem:[%s158 + $0x278] sm:$0xff] %v1538
        %1731 = vst [vmem:[%s158 + $0x280] sm:$0xff] %v1539
        %1732 = vst [vmem:[%s158 + $0x288] sm:$0xff] %v1540
        %1733 = vst [vmem:[%s158 + $0x290] sm:$0xff] %v1541
        %1734 = vst [vmem:[%s158 + $0x298] sm:$0xff] %v1542
        %1735 = vst [vmem:[%s158 + $0x2a0] sm:$0xff] %v1543
        %1736 = vst [vmem:[%s158 + $0x2a8] sm:$0xff] %v1544
        %1737 = vst [vmem:[%s158 + $0x2b0] sm:$0xff] %v1545
        %1738 = vst [vmem:[%s158 + $0x2b8] sm:$0xff] %v1546
        %1739 = vst [vmem:[%s158 + $0x2c0] sm:$0xff] %v1547
        %1740 = vst [vmem:[%s158 + $0x2c8] sm:$0xff] %v1548
        %1741 = vst [vmem:[%s158 + $0x2d0] sm:$0xff] %v1549
        %1742 = vst [vmem:[%s158 + $0x2d8] sm:$0xff] %v1550
        %1743 = vst [vmem:[%s158 + $0x2e0] sm:$0xff] %v1551
        %1744 = vst [vmem:[%s158 + $0x2e8] sm:$0xff] %v1552
        %1745 = vst [vmem:[%s158 + $0x2f0] sm:$0xff] %v1553
        %1746 = vst [vmem:[%s158 + $0x2f8] sm:$0xff] %v1554
        %1747 = vst [vmem:[%s158 + $0x300] sm:$0xff] %v1555
        %1748 = vst [vmem:[%s158 + $0x308] sm:$0xff] %v1556
        %1749 = vst [vmem:[%s158 + $0x310] sm:$0xff] %v1557
        %1750 = vst [vmem:[%s158 + $0x318] sm:$0xff] %v1558
        %1751 = vst [vmem:[%s158 + $0x320] sm:$0xff] %v1559
        %1752 = vst [vmem:[%s158 + $0x328] sm:$0xff] %v1560
        %1753 = vst [vmem:[%s158 + $0x330] sm:$0xff] %v1561
        %1754 = vst [vmem:[%s158 + $0x338] sm:$0xff] %v1562
        %1755 = vst [vmem:[%s158 + $0x340] sm:$0xff] %v1563
        %1756 = vst [vmem:[%s158 + $0x348] sm:$0xff] %v1564
        %1757 = vst [vmem:[%s158 + $0x350] sm:$0xff] %v1565
        %1758 = vst [vmem:[%s158 + $0x358] sm:$0xff] %v1566
        %1759 = vst [vmem:[%s158 + $0x360] sm:$0xff] %v1567
        %1760 = vst [vmem:[%s158 + $0x368] sm:$0xff] %v1568
        %1761 = vst [vmem:[%s158 + $0x370] sm:$0xff] %v1569
        %1762 = vst [vmem:[%s158 + $0x378] sm:$0xff] %v1570
        %1763 = vst [vmem:[%s158 + $0x380] sm:$0xff] %v1571
        %1764 = vst [vmem:[%s158 + $0x388] sm:$0xff] %v1572
        %1765 = vst [vmem:[%s158 + $0x390] sm:$0xff] %v1573
        %1766 = vst [vmem:[%s158 + $0x398] sm:$0xff] %v1574
        %1767 = vst [vmem:[%s158 + $0x3a0] sm:$0xff] %v1575
        %1768 = vst [vmem:[%s158 + $0x3a8] sm:$0xff] %v1576
        %1769 = vst [vmem:[%s158 + $0x3b0] sm:$0xff] %v1577
        %1770 = vst [vmem:[%s158 + $0x3b8] sm:$0xff] %v1578
        %1771 = vst [vmem:[%s158 + $0x3c0] sm:$0xff] %v1579
        %1772 = vst [vmem:[%s158 + $0x3c8] sm:$0xff] %v1580
        %1773 = vst [vmem:[%s158 + $0x3d0] sm:$0xff] %v1581
        %1774 = vst [vmem:[%s158 + $0x3d8] sm:$0xff] %v1582
        %1775 = vst [vmem:[%s158 + $0x3e0] sm:$0xff] %v1583
        %1776 = vst [vmem:[%s158 + $0x3e8] sm:$0xff] %v1584
        %1777 = vst [vmem:[%s158 + $0x3f0] sm:$0xff] %v1585
        %1778 = vst [vmem:[%s158 + $0x3f8] sm:$0xff] %v1586
        %1779 = vst [vmem:[%s158 + $0x400] sm:$0xff] %v1587
        %1780 = vst [vmem:[%s158 + $0x408] sm:$0xff] %v1588
        %1781 = vst [vmem:[%s158 + $0x410] sm:$0xff] %v1589
        %1782 = vst [vmem:[%s158 + $0x418] sm:$0xff] %v1590
        %1783 = vst [vmem:[%s158 + $0x420] sm:$0xff] %v1591
        %1784 = vst [vmem:[%s158 + $0x428] sm:$0xff] %v1592
        %1785 = vst [vmem:[%s158 + $0x430] sm:$0xff] %v1593
        %1786 = vst [vmem:[%s158 + $0x438] sm:$0xff] %v1594
        %1787 = vst [vmem:[%s158 + $0x440] sm:$0xff] %v1595
        %1788 = vst [vmem:[%s158 + $0x448] sm:$0xff] %v1596
        %1789 = vst [vmem:[%s158 + $0x450] sm:$0xff] %v1597
        %1790 = vst [vmem:[%s158 + $0x458] sm:$0xff] %v1598
        %1791 = vst [vmem:[%s158 + $0x460] sm:$0xff] %v1599
        %1792 = vst [vmem:[%s158 + $0x468] sm:$0xff] %v1600
        %1793 = vst [vmem:[%s158 + $0x470] sm:$0xff] %v1601
        %1794 = vst [vmem:[%s158 + $0x478] sm:$0xff] %v1602
        %1795 = vst [vmem:[%s158 + $0x480] sm:$0xff] %v1603
        %1796 = vst [vmem:[%s158 + $0x488] sm:$0xff] %v1604
        %1797 = vst [vmem:[%s158 + $0x490] sm:$0xff] %v1605
        %1798 = vst [vmem:[%s158 + $0x498] sm:$0xff] %v1606
        %1799 = vst [vmem:[%s158 + $0x4a0] sm:$0xff] %v1607
        %1800 = vst [vmem:[%s158 + $0x4a8] sm:$0xff] %v1608
        %1801 = vst [vmem:[%s158 + $0x4b0] sm:$0xff] %v1609
        %1802 = vst [vmem:[%s158 + $0x4b8] sm:$0xff] %v1610
        %1803 = vst [vmem:[%s158 + $0x4c0] sm:$0xff] %v1611
        %1804 = vst [vmem:[%s158 + $0x4c8] sm:$0xff] %v1612
        %1805 = vst [vmem:[%s158 + $0x4d0] sm:$0xff] %v1613
        %1806 = vst [vmem:[%s158 + $0x4d8] sm:$0xff] %v1614
        %1807 = vst [vmem:[%s158 + $0x4e0] sm:$0xff] %v1615
        %1808 = vst [vmem:[%s158 + $0x4e8] sm:$0xff] %v1616
        %1809 = vst [vmem:[%s158 + $0x4f0] sm:$0xff] %v1617
        %1810 = vst [vmem:[%s158 + $0x4f8] sm:$0xff] %v1618
        %1811 = vst [vmem:[%s158 + $0x500] sm:$0xff] %v1619
        %1812 = vst [vmem:[%s158 + $0x508] sm:$0xff] %v1620
        %1813 = vst [vmem:[%s158 + $0x510] sm:$0xff] %v1621
        %1814 = vst [vmem:[%s158 + $0x518] sm:$0xff] %v1622
        %1815 = vst [vmem:[%s158 + $0x520] sm:$0xff] %v1623
        %1816 = vst [vmem:[%s158 + $0x528] sm:$0xff] %v1624
        %1817 = vst [vmem:[%s158 + $0x530] sm:$0xff] %v1625
        %1818 = vst [vmem:[%s158 + $0x538] sm:$0xff] %v1626
        %1819 = vst [vmem:[%s158 + $0x540] sm:$0xff] %v1627
        %1820 = vst [vmem:[%s158 + $0x548] sm:$0xff] %v1628
        %1821 = vst [vmem:[%s158 + $0x550] sm:$0xff] %v1629
        %1822 = vst [vmem:[%s158 + $0x558] sm:$0xff] %v1630
        %1823 = vst [vmem:[%s158 + $0x560] sm:$0xff] %v1631
        %1824 = vst [vmem:[%s158 + $0x568] sm:$0xff] %v1632
        %1825 = vst [vmem:[%s158 + $0x570] sm:$0xff] %v1633
        %1826 = vst [vmem:[%s158 + $0x578] sm:$0xff] %v1634
        %1827 = vst [vmem:[%s158 + $0x580] sm:$0xff] %v1635
        %1828 = vst [vmem:[%s158 + $0x588] sm:$0xff] %v1636
        %1829 = vst [vmem:[%s158 + $0x590] sm:$0xff] %v1637
        %1830 = vst [vmem:[%s158 + $0x598] sm:$0xff] %v1638
        %1831 = vst [vmem:[%s158 + $0x5a0] sm:$0xff] %v1639
        %1832 = vst [vmem:[%s158 + $0x5a8] sm:$0xff] %v1640
        %1833 = vst [vmem:[%s158 + $0x5b0] sm:$0xff] %v1641
        %1834 = vst [vmem:[%s158 + $0x5b8] sm:$0xff] %v1642
        %1835 = vst [vmem:[%s158 + $0x5c0] sm:$0xff] %v1643
        %1836 = vst [vmem:[%s158 + $0x5c8] sm:$0xff] %v1644
        %1837 = vst [vmem:[%s158 + $0x5d0] sm:$0xff] %v1645
        %1838 = vst [vmem:[%s158 + $0x5d8] sm:$0xff] %v1646
        %1839 = vst [vmem:[%s158 + $0x5e0] sm:$0xff] %v1647
        %1840 = vst [vmem:[%s158 + $0x5e8] sm:$0xff] %v1648
        %1841 = vst [vmem:[%s158 + $0x5f0] sm:$0xff] %v1649
        %1842 = vst [vmem:[%s158 + $0x5f8] sm:$0xff] %v1650
        %p1843 = scmp.lt.s32.totalorder %s14, 1
        %s1844 = scalar_select %p1843, %s14, 1
        %s1845 = smul.addr %s1844, 192
        %s1846 = smul.addr %s1845, 8
        %s1847 = scalar_lea.vmem %s2, %s1846
        // Predicated region
        $region33: #{conv_transpose2d_leaky.1} parent=27 // pred_check
          %p1848 = pneg %p79
        $region34: #{conv_transpose2d_leaky.1} parent=27 // pred_check_branch
          %1850 = sbr.rel (%p1848) target = $region36
        $region35: #{conv_transpose2d_leaky.1} parent=27 // pred_region
          _
        $region36: #{conv_transpose2d_leaky.1} parent=27 // pred_fallthru
          _
      $region28: #{conv_transpose2d_leaky.1} parent=5 // pred_fallthru
        _
      %p1851 = scmp.le.s32.totalorder 2, %s9
      // Predicated region
      $region37: #{conv_transpose2d_leaky.1} parent=5 // pred_check
        %p1852 = pneg %p1851
      $region38: #{conv_transpose2d_leaky.1} parent=5 // pred_check_branch
        %1854 = sbr.rel (%p1852) target = $region40
      $region39: #{conv_transpose2d_leaky.1} parent=5 // pred_region
        %s1855 = ssub.s32 %s9, 2
        // Predicated region
        $region41: #{conv_transpose2d_leaky.1} parent=39 // pred_check
          %p1856 = pneg %p85
        $region42: #{conv_transpose2d_leaky.1} parent=39 // pred_check_branch
          %1858 = sbr.rel (%p1856) target = $region44
        $region43: #{conv_transpose2d_leaky.1} parent=39 // pred_region
          %p1859 = scmp.lt.s32.totalorder %s15, 1
          %s1860 = scalar_select %p1859, %s15, 1
          %s1861 = smul.addr %s1860, 192
          %s1862 = smul.addr %s1861, 8
          %s1863 = scalar_lea.vmem %s2, %s1862
        $region44: #{conv_transpose2d_leaky.1} parent=39 // pred_fallthru
          _
      $region40: #{conv_transpose2d_leaky.1} parent=5 // pred_fallthru
        _
    $region6: #{conv_transpose2d_leaky.1} parent=1 // loop_footer
      %s13 = sadd.s32 1, %s9
    $region7: #{conv_transpose2d_leaky.1} parent=1 // loop_footer_branch
      %8 = sbr.rel target = $region3
    $region8: #{conv_transpose2d_leaky.1} parent=1 // loop_exit
      _
    %1864 = vsyncpa [#allocation3], 1
    %s1865 = scalar_lea.sflag [#allocation3], 1
    %1866 = vsyncpa %s1865, 1

</llo_original>
